<compile_context>
chip_gen: v5e
topology: v5e:2x2
jax: 0.10.0
libtpu: 0.0.40
codegen_flags: <defaults>
</compile_context>

<pallas_src>
import jax
import jax.numpy as jnp
from jax.experimental import pallas as pl
from jax.experimental.pallas import tpu as pltpu


def _round_up(x, m):
    return (x + m - 1) // m * m


def _yolo_loss_kernel(pred_ref, targ_ref, anc_ref, out_ref):
    """One tile of TN cells.

    pred_ref: (5+NC, TN)  raw predictions, channels on sublanes, cells on lanes
    targ_ref: (6, TN)     [obj, x, y, w, h, class]
    anc_ref:  (2, TN)     per-cell anchor (w, h)
    out_ref:  (8, TN)     resident partial-sum accumulator:
        row 0: sum of no-object BCE      row 1: no-object cell count
        row 2: sum of object BCE         row 3: object cell count
        row 4: sum of box squared error  row 5: sum of class cross-entropy
        rows 6,7: unused (kept for an 8-sublane-aligned output block)
    """
    step = pl.program_id(0)

    @pl.when(step == 0)
    def _init():
        out_ref[...] = jnp.zeros_like(out_ref)

    # Load channel groups straight from the refs (sublane-offset loads) and
    # cast to f32 after the load (inputs may be bf16 etc.).
    p_obj = pred_ref[0:1, :].astype(jnp.float32)   # (1, TN) objectness logit
    p_xy = pred_ref[1:3, :].astype(jnp.float32)    # (2, TN)
    p_wh = pred_ref[3:5, :].astype(jnp.float32)    # (2, TN)
    p_cls = pred_ref[5:, :].astype(jnp.float32)    # (NC, TN)

    t_obj = targ_ref[0:1, :].astype(jnp.float32)   # (1, TN)
    t_xy = targ_ref[1:3, :].astype(jnp.float32)    # (2, TN)
    t_wh = targ_ref[3:5, :].astype(jnp.float32)    # (2, TN)
    t_cls = targ_ref[5:6, :].astype(jnp.float32)   # (1, TN)
    anc = anc_ref[...].astype(jnp.float32)         # (2, TN)

    obj = t_obj == 1.0                             # (1, TN) bool
    noobj = t_obj == 0.0                           # padded cells use t_obj = -1

    def bce_with_logits(z, y):
        # Numerically-stable BCEWithLogits (same formula PyTorch documents).
        return jnp.maximum(z, 0.0) - z * y + jnp.log(1.0 + jnp.exp(-jnp.abs(z)))

    # ---- no-object loss (target objectness is 0 on no-object cells) --------
    noobj_bce = bce_with_logits(p_obj, t_obj)

    # ---- object loss: BCE against (detached) IoU of decoded boxes ----------
    sig_xy = 1.0 / (1.0 + jnp.exp(-p_xy))          # sigmoid
    bp_wh = jnp.exp(p_wh) * anc
    b1_min = sig_xy - 0.5 * bp_wh
    b1_max = sig_xy + 0.5 * bp_wh
    b2_min = t_xy - 0.5 * t_wh
    b2_max = t_xy + 0.5 * t_wh
    iw = jnp.maximum(jnp.minimum(b1_max, b2_max) - jnp.maximum(b1_min, b2_min), 0.0)
    inter = iw[0:1, :] * iw[1:2, :]
    area1 = jnp.abs(bp_wh[0:1, :] * bp_wh[1:2, :])
    area2 = jnp.abs(t_wh[0:1, :] * t_wh[1:2, :])
    iou = inter / (area1 + area2 - inter + 1e-6)
    obj_bce = bce_with_logits(p_obj, iou * t_obj)  # t_obj == 1 on obj cells

    # ---- box MSE (x,y against sigmoid(pred), w,h in log-anchor space) ------
    t_wh_log = jnp.log(1e-16 + t_wh / anc)
    d_xy = sig_xy - t_xy
    d_wh = p_wh - t_wh_log
    sq = d_xy * d_xy + d_wh * d_wh                 # (2, TN)
    sq_cell = sq[0:1, :] + sq[1:2, :]              # (1, TN): sum over 4 coords

    # ---- class cross-entropy ------------------------------------------------
    m = jnp.max(p_cls, axis=0, keepdims=True)                        # (1, TN)
    lse = m + jnp.log(jnp.sum(jnp.exp(p_cls - m), axis=0, keepdims=True))
    cls_idx = jax.lax.broadcasted_iota(jnp.int32, p_cls.shape, 0).astype(jnp.float32)
    # one-hot at floor(label): matches .long() truncation for non-negative labels
    onehot = (t_cls >= cls_idx) & (t_cls < cls_idx + 1.0)             # (NC, TN)
    picked = jnp.sum(jnp.where(onehot, p_cls, 0.0), axis=0, keepdims=True)
    ce = lse - picked                                                 # (1, TN)

    ones = jnp.ones_like(p_obj)
    zeros = jnp.zeros_like(p_obj)

    # Accumulate lane-wise partial sums (final cross-lane reduce is done in JAX
    # on the tiny (8, TN) output).
    out_ref[0:1, :] += jnp.where(noobj, noobj_bce, zeros)
    out_ref[1:2, :] += jnp.where(noobj, ones, zeros)
    out_ref[2:3, :] += jnp.where(obj, obj_bce, zeros)
    out_ref[3:4, :] += jnp.where(obj, ones, zeros)
    out_ref[4:5, :] += jnp.where(obj, sq_cell, zeros)
    out_ref[5:6, :] += jnp.where(obj, ce, zeros)


def yolo_loss(predictions, target, anchors, *, block_cells=4096,
              lambda_class=1.0, lambda_noobj=1.0, lambda_obj=1.0, lambda_box=1.0):
    """Pallas implementation of YoloLoss.forward (single scale).

    predictions: (B, A, S, S, 5 + num_classes)
    target:      (B, A, S, S, 6)  -> [obj, x, y, w, h, class]
    anchors:     (A, 2)
    """
    B, A, S1, S2, C = predictions.shape
    assert target.shape == (B, A, S1, S2, 6)
    assert anchors.shape == (A, 2)
    N = B * A * S1 * S2

    # Lane-dense layout: channels on sublanes, cells on lanes.
    pred_t = predictions.reshape(N, C).T                               # (C, N)
    targ_t = target.reshape(N, 6).T                                    # (6, N)
    anc_t = jnp.broadcast_to(
        anchors.reshape(1, A, 1, 1, 2).astype(jnp.float32),
        (B, A, S1, S2, 2)).reshape(N, 2).T                             # (2, N)

    TN = min(int(block_cells), _round_up(N, 128))
    TN = _round_up(TN, 128)
    Np = _round_up(N, TN)
    pad = Np - N
    if pad:
        pred_t = jnp.pad(pred_t, ((0, 0), (0, pad)))
        targ_t = jnp.pad(targ_t, ((0, 0), (0, pad)))
        # Padded cells: objectness -1 => neither "obj" nor "noobj" (not counted).
        targ_t = targ_t.at[0, N:].set(-1.0)
        anc_t = jnp.pad(anc_t, ((0, 0), (0, pad)), constant_values=1.0)

    num_blocks = Np // TN

    out = pl.pallas_call(
        _yolo_loss_kernel,
        out_shape=jax.ShapeDtypeStruct((8, TN), jnp.float32),
        grid_spec=pltpu.PrefetchScalarGridSpec(
            num_scalar_prefetch=0,
            grid=(num_blocks,),
            in_specs=[
                pl.BlockSpec((C, TN), lambda i: (0, i)),
                pl.BlockSpec((6, TN), lambda i: (0, i)),
                pl.BlockSpec((2, TN), lambda i: (0, i)),
            ],
            out_specs=pl.BlockSpec((8, TN), lambda i: (0, 0)),
        ),
        compiler_params=pltpu.CompilerParams(
            dimension_semantics=("arbitrary",)),  # resident accumulator output
    )(pred_t, targ_t, anc_t)

    parts = jnp.sum(out, axis=1)                                       # (8,)
    n_noobj = parts[1]
    n_obj = parts[3]
    no_object_loss = parts[0] / n_noobj
    object_loss = parts[2] / n_obj
    box_loss = parts[4] / (4.0 * n_obj)
    class_loss = parts[5] / n_obj
    return (lambda_box * box_loss + lambda_obj * object_loss
            + lambda_noobj * no_object_loss + lambda_class * class_loss)


def _yolo_loss_reference(pred, targ, anchors):
    """Pure-JAX reference with the same semantics as the PyTorch module."""
    pred = pred.astype(jnp.float32)
    targ = targ.astype(jnp.float32)
    anchors = anchors.astype(jnp.float32)
    A = anchors.shape[0]
    obj = targ[..., 0] == 1.0
    noobj = targ[..., 0] == 0.0

    def bce(z, y):
        return jnp.maximum(z, 0.0) - z * y + jnp.log1p(jnp.exp(-jnp.abs(z)))

    cnt_noobj = jnp.sum(noobj.astype(jnp.float32))
    cnt_obj = jnp.sum(obj.astype(jnp.float32))

    no_object_loss = jnp.sum(
        jnp.where(noobj, bce(pred[..., 0], targ[..., 0]), 0.0)) / cnt_noobj

    anc = anchors.reshape(1, A, 1, 1, 2)
    bp_xy = jax.nn.sigmoid(pred[..., 1:3])
    bp_wh = jnp.exp(pred[..., 3:5]) * anc
    t_xy = targ[..., 1:3]
    t_wh = targ[..., 3:5]
    b1min, b1max = bp_xy - bp_wh / 2, bp_xy + bp_wh / 2
    b2min, b2max = t_xy - t_wh / 2, t_xy + t_wh / 2
    iw = jnp.maximum(jnp.minimum(b1max, b2max) - jnp.maximum(b1min, b2min), 0.0)
    inter = iw[..., 0] * iw[..., 1]
    a1 = jnp.abs(bp_wh[..., 0] * bp_wh[..., 1])
    a2 = jnp.abs(t_wh[..., 0] * t_wh[..., 1])
    iou = inter / (a1 + a2 - inter + 1e-6)
    object_loss = jnp.sum(
        jnp.where(obj, bce(pred[..., 0], iou * targ[..., 0]), 0.0)) / cnt_obj

    t_wh_log = jnp.log(1e-16 + t_wh / anc)
    sq = jnp.sum((bp_xy - t_xy) ** 2 + (pred[..., 3:5] - t_wh_log) ** 2, axis=-1)
    box_loss = jnp.sum(jnp.where(obj, sq, 0.0)) / (4.0 * cnt_obj)

    logits = pred[..., 5:]
    lse = jax.scipy.special.logsumexp(logits, axis=-1)
    labels = targ[..., 5].astype(jnp.int32)
    picked = jnp.take_along_axis(logits, labels[..., None], axis=-1)[..., 0]
    class_loss = jnp.sum(jnp.where(obj, lse - picked, 0.0)) / cnt_obj

    return box_loss + object_loss + no_object_loss + class_loss


if __name__ == "__main__":
    key = jax.random.PRNGKey(0)
    kp, ko, kxy, kwh, kc, ka = jax.random.split(key, 6)

    B, A, S, NC = 2, 3, 16, 8
    C = 5 + NC

    predictions = 0.5 * jax.random.normal(kp, (B, A, S, S, C), dtype=jnp.float32)

    obj_ind = (jax.random.uniform(ko, (B, A, S, S)) < 0.2).astype(jnp.float32)
    obj_ind = obj_ind.at[0, 0, 0, 0].set(1.0)   # guarantee >= 1 object cell
    obj_ind = obj_ind.at[0, 0, 0, 1].set(0.0)   # guarantee >= 1 background cell
    t_xy = jax.random.uniform(kxy, (B, A, S, S, 2), minval=0.05, maxval=0.95)
    t_wh = jax.random.uniform(kwh, (B, A, S, S, 2), minval=0.1, maxval=2.0)
    t_cls = jax.random.randint(kc, (B, A, S, S, 1), 0, NC).astype(jnp.float32)
    target = jnp.concatenate([obj_ind[..., None], t_xy, t_wh, t_cls], axis=-1)

    anchors = jax.random.uniform(ka, (A, 2), minval=0.5, maxval=2.0)

    loss = yolo_loss(predictions, target, anchors)
    jax.block_until_ready(loss)

    ref = _yolo_loss_reference(predictions, target, anchors)
    assert jnp.allclose(loss, ref, rtol=1e-3, atol=1e-3), (float(loss), float(ref))

    print("KERNEL_OK")
</pallas_src>

<mosaic_0001>
module attributes {stable_mosaic.version = 11 : i64} {
  func.func @_yolo_loss_kernel(%arg0: i32, %arg1: memref<13x1536xf32, #tpu.memory_space<vmem>>, %arg2: memref<6x1536xf32, #tpu.memory_space<vmem>>, %arg3: memref<2x1536xf32, #tpu.memory_space<vmem>>, %arg4: memref<8x1536xf32, #tpu.memory_space<vmem>>) attributes {dimension_semantics = [#tpu.dimension_semantics<arbitrary>], iteration_bounds = array<i64: 1>, scalar_prefetch = 0 : i64, scratch_operands = 0 : i64, tpu.core_type = #tpu.core_type<tc>, window_params = [{transform_indices = @transform_0, window_bounds = array<i64: 13, 1536>}, {transform_indices = @transform_1, window_bounds = array<i64: 6, 1536>}, {transform_indices = @transform_2, window_bounds = array<i64: 2, 1536>}, {pipeline_mode = #tpu.pipeline_mode<synchronous>, transform_indices = @transform_3, window_bounds = array<i64: 8, 1536>}]} {
    %c0_i32 = arith.constant 0 : i32
    %0 = arith.cmpi eq, %arg0, %c0_i32 : i32
    %1 = arith.extui %0 : i1 to i32
    %c0_i32_0 = arith.constant 0 : i32
    %2 = arith.cmpi ne, %1, %c0_i32_0 : i32
    scf.if %2 {
      %cst_61 = arith.constant 0.000000e+00 : f32
      %144 = vector.broadcast %cst_61 : f32 to vector<8x1536xf32>
      %c0_62 = arith.constant 0 : index
      %c0_63 = arith.constant 0 : index
      %145 = vector.load %arg4[%c0_62, %c0_63] : memref<8x1536xf32, #tpu.memory_space<vmem>>, vector<8x1536xf32>
      tpu.vector_store %arg4[%c0_62, %c0_63], %144 {strides = array<i32>} : memref<8x1536xf32, #tpu.memory_space<vmem>>, vector<8x1536xf32>,
    } else {
    }
    %c0 = arith.constant 0 : index
    %c0_1 = arith.constant 0 : index
    %3 = vector.load %arg1[%c0, %c0_1] : memref<13x1536xf32, #tpu.memory_space<vmem>>, vector<1x1536xf32>
    %c1 = arith.constant 1 : index
    %c0_2 = arith.constant 0 : index
    %4 = vector.load %arg1[%c1, %c0_2] : memref<13x1536xf32, #tpu.memory_space<vmem>>, vector<2x1536xf32>
    %c3 = arith.constant 3 : index
    %c0_3 = arith.constant 0 : index
    %5 = vector.load %arg1[%c3, %c0_3] : memref<13x1536xf32, #tpu.memory_space<vmem>>, vector<2x1536xf32>
    %c5 = arith.constant 5 : index
    %c0_4 = arith.constant 0 : index
    %6 = vector.load %arg1[%c5, %c0_4] : memref<13x1536xf32, #tpu.memory_space<vmem>>, vector<8x1536xf32>
    %c0_5 = arith.constant 0 : index
    %c0_6 = arith.constant 0 : index
    %7 = vector.load %arg2[%c0_5, %c0_6] : memref<6x1536xf32, #tpu.memory_space<vmem>>, vector<1x1536xf32>
    %c1_7 = arith.constant 1 : index
    %c0_8 = arith.constant 0 : index
    %8 = vector.load %arg2[%c1_7, %c0_8] : memref<6x1536xf32, #tpu.memory_space<vmem>>, vector<2x1536xf32>
    %c3_9 = arith.constant 3 : index
    %c0_10 = arith.constant 0 : index
    %9 = vector.load %arg2[%c3_9, %c0_10] : memref<6x1536xf32, #tpu.memory_space<vmem>>, vector<2x1536xf32>
    %c5_11 = arith.constant 5 : index
    %c0_12 = arith.constant 0 : index
    %10 = vector.load %arg2[%c5_11, %c0_12] : memref<6x1536xf32, #tpu.memory_space<vmem>>, vector<1x1536xf32>
    %c0_13 = arith.constant 0 : index
    %c0_14 = arith.constant 0 : index
    %11 = vector.load %arg3[%c0_13, %c0_14] : memref<2x1536xf32, #tpu.memory_space<vmem>>, vector<2x1536xf32>
    %cst = arith.constant 1.000000e+00 : f32
    %12 = vector.broadcast %cst : f32 to vector<1x1536xf32>
    %13 = arith.cmpf oeq, %7, %12 : vector<1x1536xf32>
    %cst_15 = arith.constant 0.000000e+00 : f32
    %14 = vector.broadcast %cst_15 : f32 to vector<1x1536xf32>
    %15 = arith.cmpf oeq, %7, %14 : vector<1x1536xf32>
    %cst_16 = arith.constant 0.000000e+00 : f32
    %16 = vector.broadcast %cst_16 : f32 to vector<1x1536xf32>
    %17 = arith.maximumf %3, %16 : vector<1x1536xf32>
    %18 = arith.mulf %3, %7 : vector<1x1536xf32>
    %19 = arith.subf %17, %18 : vector<1x1536xf32>
    %20 = math.absf %3 : vector<1x1536xf32>
    %cst_17 = arith.constant 0.000000e+00 : f32
    %21 = vector.broadcast %cst_17 : f32 to vector<1x1536xf32>
    %22 = arith.subf %21, %20 : vector<1x1536xf32>
    %23 = math.exp %22 : vector<1x1536xf32>
    %cst_18 = arith.constant 1.000000e+00 : f32
    %24 = vector.broadcast %cst_18 : f32 to vector<1x1536xf32>
    %25 = arith.addf %24, %23 : vector<1x1536xf32>
    %26 = math.log %25 : vector<1x1536xf32>
    %27 = arith.addf %19, %26 : vector<1x1536xf32>
    %cst_19 = arith.constant 0.000000e+00 : f32
    %28 = vector.broadcast %cst_19 : f32 to vector<2x1536xf32>
    %29 = arith.subf %28, %4 : vector<2x1536xf32>
    %30 = math.exp %29 : vector<2x1536xf32>
    %cst_20 = arith.constant 1.000000e+00 : f32
    %31 = vector.broadcast %cst_20 : f32 to vector<2x1536xf32>
    %32 = arith.addf %31, %30 : vector<2x1536xf32>
    %cst_21 = arith.constant 1.000000e+00 : f32
    %33 = vector.broadcast %cst_21 : f32 to vector<2x1536xf32>
    %34 = arith.divf %33, %32 : vector<2x1536xf32>
    %35 = math.exp %5 : vector<2x1536xf32>
    %36 = arith.mulf %35, %11 : vector<2x1536xf32>
    %cst_22 = arith.constant 5.000000e-01 : f32
    %37 = vector.broadcast %cst_22 : f32 to vector<2x1536xf32>
    %38 = arith.mulf %37, %36 : vector<2x1536xf32>
    %39 = arith.subf %34, %38 : vector<2x1536xf32>
    %cst_23 = arith.constant 5.000000e-01 : f32
    %40 = vector.broadcast %cst_23 : f32 to vector<2x1536xf32>
    %41 = arith.mulf %40, %36 : vector<2x1536xf32>
    %42 = arith.addf %34, %41 : vector<2x1536xf32>
    %cst_24 = arith.constant 5.000000e-01 : f32
    %43 = vector.broadcast %cst_24 : f32 to vector<2x1536xf32>
    %44 = arith.mulf %43, %9 : vector<2x1536xf32>
    %45 = arith.subf %8, %44 : vector<2x1536xf32>
    %cst_25 = arith.constant 5.000000e-01 : f32
    %46 = vector.broadcast %cst_25 : f32 to vector<2x1536xf32>
    %47 = arith.mulf %46, %9 : vector<2x1536xf32>
    %48 = arith.addf %8, %47 : vector<2x1536xf32>
    %49 = arith.minimumf %42, %48 : vector<2x1536xf32>
    %50 = arith.maximumf %39, %45 : vector<2x1536xf32>
    %51 = arith.subf %49, %50 : vector<2x1536xf32>
    %cst_26 = arith.constant 0.000000e+00 : f32
    %52 = vector.broadcast %cst_26 : f32 to vector<2x1536xf32>
    %53 = arith.maximumf %51, %52 : vector<2x1536xf32>
    %54 = vector.extract_strided_slice %53 {offsets = [0, 0], sizes = [1, 1536], strides = [1, 1]} : vector<2x1536xf32> to vector<1x1536xf32>
    %55 = vector.extract_strided_slice %53 {offsets = [1, 0], sizes = [1, 1536], strides = [1, 1]} : vector<2x1536xf32> to vector<1x1536xf32>
    %56 = arith.mulf %54, %55 : vector<1x1536xf32>
    %57 = vector.extract_strided_slice %36 {offsets = [0, 0], sizes = [1, 1536], strides = [1, 1]} : vector<2x1536xf32> to vector<1x1536xf32>
    %58 = vector.extract_strided_slice %36 {offsets = [1, 0], sizes = [1, 1536], strides = [1, 1]} : vector<2x1536xf32> to vector<1x1536xf32>
    %59 = arith.mulf %57, %58 : vector<1x1536xf32>
    %60 = math.absf %59 : vector<1x1536xf32>
    %61 = vector.extract_strided_slice %9 {offsets = [0, 0], sizes = [1, 1536], strides = [1, 1]} : vector<2x1536xf32> to vector<1x1536xf32>
    %62 = vector.extract_strided_slice %9 {offsets = [1, 0], sizes = [1, 1536], strides = [1, 1]} : vector<2x1536xf32> to vector<1x1536xf32>
    %63 = arith.mulf %61, %62 : vector<1x1536xf32>
    %64 = math.absf %63 : vector<1x1536xf32>
    %65 = arith.addf %60, %64 : vector<1x1536xf32>
    %66 = arith.subf %65, %56 : vector<1x1536xf32>
    %cst_27 = arith.constant 9.99999997E-7 : f32
    %67 = vector.broadcast %cst_27 : f32 to vector<1x1536xf32>
    %68 = arith.addf %66, %67 : vector<1x1536xf32>
    %69 = arith.divf %56, %68 : vector<1x1536xf32>
    %70 = arith.mulf %69, %7 : vector<1x1536xf32>
    %cst_28 = arith.constant 0.000000e+00 : f32
    %71 = vector.broadcast %cst_28 : f32 to vector<1x1536xf32>
    %72 = arith.maximumf %3, %71 : vector<1x1536xf32>
    %73 = arith.mulf %3, %70 : vector<1x1536xf32>
    %74 = arith.subf %72, %73 : vector<1x1536xf32>
    %75 = math.absf %3 : vector<1x1536xf32>
    %cst_29 = arith.constant 0.000000e+00 : f32
    %76 = vector.broadcast %cst_29 : f32 to vector<1x1536xf32>
    %77 = arith.subf %76, %75 : vector<1x1536xf32>
    %78 = math.exp %77 : vector<1x1536xf32>
    %cst_30 = arith.constant 1.000000e+00 : f32
    %79 = vector.broadcast %cst_30 : f32 to vector<1x1536xf32>
    %80 = arith.addf %79, %78 : vector<1x1536xf32>
    %81 = math.log %80 : vector<1x1536xf32>
    %82 = arith.addf %74, %81 : vector<1x1536xf32>
    %83 = arith.divf %9, %11 : vector<2x1536xf32>
    %cst_31 = arith.constant 1.000000e-16 : f32
    %84 = vector.broadcast %cst_31 : f32 to vector<2x1536xf32>
    %85 = arith.addf %84, %83 : vector<2x1536xf32>
    %86 = math.log %85 : vector<2x1536xf32>
    %87 = arith.subf %34, %8 : vector<2x1536xf32>
    %88 = arith.subf %5, %86 : vector<2x1536xf32>
    %89 = arith.mulf %87, %87 : vector<2x1536xf32>
    %90 = arith.mulf %88, %88 : vector<2x1536xf32>
    %91 = arith.addf %89, %90 : vector<2x1536xf32>
    %92 = vector.extract_strided_slice %91 {offsets = [0, 0], sizes = [1, 1536], strides = [1, 1]} : vector<2x1536xf32> to vector<1x1536xf32>
    %93 = vector.extract_strided_slice %91 {offsets = [1, 0], sizes = [1, 1536], strides = [1, 1]} : vector<2x1536xf32> to vector<1x1536xf32>
    %94 = arith.addf %92, %93 : vector<1x1536xf32>
    %cst_32 = arith.constant dense<0xFF800000> : vector<1536xf32>
    %95 = vector.multi_reduction <maximumf>, %6, %cst_32 [0] : vector<8x1536xf32> to vector<1536xf32>
    %96 = vector.shape_cast %95 : vector<1536xf32> to vector<1x1536xf32>
    %97 = vector.broadcast %96 : vector<1x1536xf32> to vector<8x1536xf32>
    %98 = arith.subf %6, %97 : vector<8x1536xf32>
    %99 = math.exp %98 : vector<8x1536xf32>
    %cst_33 = arith.constant dense<0.000000e+00> : vector<1536xf32>
    %100 = vector.multi_reduction <add>, %99, %cst_33 [0] : vector<8x1536xf32> to vector<1536xf32>
    %101 = vector.shape_cast %100 : vector<1536xf32> to vector<1x1536xf32>
    %102 = math.log %101 : vector<1x1536xf32>
    %103 = arith.addf %96, %102 : vector<1x1536xf32>
    %104 = tpu.iota {dimensions = array<i32: 0>} : vector<8x1536xi32>
    %105 = arith.sitofp %104 : vector<8x1536xi32> to vector<8x1536xf32>
    %106 = vector.broadcast %10 : vector<1x1536xf32> to vector<8x1536xf32>
    %107 = arith.cmpf oge, %106, %105 : vector<8x1536xf32>
    %cst_34 = arith.constant 1.000000e+00 : f32
    %108 = vector.broadcast %cst_34 : f32 to vector<8x1536xf32>
    %109 = arith.addf %105, %108 : vector<8x1536xf32>
    %110 = vector.broadcast %10 : vector<1x1536xf32> to vector<8x1536xf32>
    %111 = arith.cmpf olt, %110, %109 : vector<8x1536xf32>
    %112 = arith.andi %107, %111 : vector<8x1536xi1>
    %cst_35 = arith.constant 0.000000e+00 : f32
    %113 = vector.broadcast %cst_35 : f32 to vector<8x1536xf32>
    %114 = arith.select %112, %6, %113 : vector<8x1536xi1>, vector<8x1536xf32>
    %cst_36 = arith.constant dense<0.000000e+00> : vector<1536xf32>
    %115 = vector.multi_reduction <add>, %114, %cst_36 [0] : vector<8x1536xf32> to vector<1536xf32>
    %116 = vector.shape_cast %115 : vector<1536xf32> to vector<1x1536xf32>
    %117 = arith.subf %103, %116 : vector<1x1536xf32>
    %cst_37 = arith.constant 1.000000e+00 : f32
    %118 = vector.broadcast %cst_37 : f32 to vector<1x1536xf32>
    %cst_38 = arith.constant 0.000000e+00 : f32
    %119 = vector.broadcast %cst_38 : f32 to vector<1x1536xf32>
    %c0_39 = arith.constant 0 : index
    %c0_40 = arith.constant 0 : index
    %120 = vector.load %arg4[%c0_39, %c0_40] : memref<8x1536xf32, #tpu.memory_space<vmem>>, vector<1x1536xf32>
    %121 = arith.select %15, %27, %119 : vector<1x1536xi1>, vector<1x1536xf32>
    %122 = arith.addf %120, %121 : vector<1x1536xf32>
    %c0_41 = arith.constant 0 : index
    %c0_42 = arith.constant 0 : index
    %123 = vector.load %arg4[%c0_41, %c0_42] : memref<8x1536xf32, #tpu.memory_space<vmem>>, vector<1x1536xf32>
    tpu.vector_store %arg4[%c0_41, %c0_42], %122 {strides = array<i32>} : memref<8x1536xf32, #tpu.memory_space<vmem>>, vector<1x1536xf32>,
    %c1_43 = arith.constant 1 : index
    %c0_44 = arith.constant 0 : index
    %124 = vector.load %arg4[%c1_43, %c0_44] : memref<8x1536xf32, #tpu.memory_space<vmem>>, vector<1x1536xf32>
    %125 = arith.select %15, %118, %119 : vector<1x1536xi1>, vector<1x1536xf32>
    %126 = arith.addf %124, %125 : vector<1x1536xf32>
    %c1_45 = arith.constant 1 : index
    %c0_46 = arith.constant 0 : index
    %127 = vector.load %arg4[%c1_45, %c0_46] : memref<8x1536xf32, #tpu.memory_space<vmem>>, vector<1x1536xf32>
    tpu.vector_store %arg4[%c1_45, %c0_46], %126 {strides = array<i32>} : memref<8x1536xf32, #tpu.memory_space<vmem>>, vector<1x1536xf32>,
    %c2 = arith.constant 2 : index
    %c0_47 = arith.constant 0 : index
    %128 = vector.load %arg4[%c2, %c0_47] : memref<8x1536xf32, #tpu.memory_space<vmem>>, vector<1x1536xf32>
    %129 = arith.select %13, %82, %119 : vector<1x1536xi1>, vector<1x1536xf32>
    %130 = arith.addf %128, %129 : vector<1x1536xf32>
    %c2_48 = arith.constant 2 : index
    %c0_49 = arith.constant 0 : index
    %131 = vector.load %arg4[%c2_48, %c0_49] : memref<8x1536xf32, #tpu.memory_space<vmem>>, vector<1x1536xf32>
    tpu.vector_store %arg4[%c2_48, %c0_49], %130 {strides = array<i32>} : memref<8x1536xf32, #tpu.memory_space<vmem>>, vector<1x1536xf32>,
    %c3_50 = arith.constant 3 : index
    %c0_51 = arith.constant 0 : index
    %132 = vector.load %arg4[%c3_50, %c0_51] : memref<8x1536xf32, #tpu.memory_space<vmem>>, vector<1x1536xf32>
    %133 = arith.select %13, %118, %119 : vector<1x1536xi1>, vector<1x1536xf32>
    %134 = arith.addf %132, %133 : vector<1x1536xf32>
    %c3_52 = arith.constant 3 : index
    %c0_53 = arith.constant 0 : index
    %135 = vector.load %arg4[%c3_52, %c0_53] : memref<8x1536xf32, #tpu.memory_space<vmem>>, vector<1x1536xf32>
    tpu.vector_store %arg4[%c3_52, %c0_53], %134 {strides = array<i32>} : memref<8x1536xf32, #tpu.memory_space<vmem>>, vector<1x1536xf32>,
    %c4 = arith.constant 4 : index
    %c0_54 = arith.constant 0 : index
    %136 = vector.load %arg4[%c4, %c0_54] : memref<8x1536xf32, #tpu.memory_space<vmem>>, vector<1x1536xf32>
    %137 = arith.select %13, %94, %119 : vector<1x1536xi1>, vector<1x1536xf32>
    %138 = arith.addf %136, %137 : vector<1x1536xf32>
    %c4_55 = arith.constant 4 : index
    %c0_56 = arith.constant 0 : index
    %139 = vector.load %arg4[%c4_55, %c0_56] : memref<8x1536xf32, #tpu.memory_space<vmem>>, vector<1x1536xf32>
    tpu.vector_store %arg4[%c4_55, %c0_56], %138 {strides = array<i32>} : memref<8x1536xf32, #tpu.memory_space<vmem>>, vector<1x1536xf32>,
    %c5_57 = arith.constant 5 : index
    %c0_58 = arith.constant 0 : index
    %140 = vector.load %arg4[%c5_57, %c0_58] : memref<8x1536xf32, #tpu.memory_space<vmem>>, vector<1x1536xf32>
    %141 = arith.select %13, %117, %119 : vector<1x1536xi1>, vector<1x1536xf32>
    %142 = arith.addf %140, %141 : vector<1x1536xf32>
    %c5_59 = arith.constant 5 : index
    %c0_60 = arith.constant 0 : index
    %143 = vector.load %arg4[%c5_59, %c0_60] : memref<8x1536xf32, #tpu.memory_space<vmem>>, vector<1x1536xf32>
    tpu.vector_store %arg4[%c5_59, %c0_60], %142 {strides = array<i32>} : memref<8x1536xf32, #tpu.memory_space<vmem>>, vector<1x1536xf32>,
    return
  }
  func.func @transform_0(%arg0: i32) -> (i32, i32) {
    %c0_i32 = arith.constant 0 : i32
    %c0_i32_0 = arith.constant 0 : i32
    return %c0_i32, %arg0 : i32, i32
  }
  func.func @transform_1(%arg0: i32) -> (i32, i32) {
    %c0_i32 = arith.constant 0 : i32
    %c0_i32_0 = arith.constant 0 : i32
    return %c0_i32, %arg0 : i32, i32
  }
  func.func @transform_2(%arg0: i32) -> (i32, i32) {
    %c0_i32 = arith.constant 0 : i32
    %c0_i32_0 = arith.constant 0 : i32
    return %c0_i32, %arg0 : i32, i32
  }
  func.func @transform_3(%arg0: i32) -> (i32, i32) {
    %c0_i32 = arith.constant 0 : i32
    %c0_i32_0 = arith.constant 0 : i32
    %c0_i32_1 = arith.constant 0 : i32
    return %c0_i32, %c0_i32_0 : i32, i32
  }
}

</mosaic_0001>

<llo_original>
// kernel: tpu_custom_call.1
$region0: #{tpu_custom_call.1}
  #allocation0 [shape = 'u32[]', space=smem, size = 0x4, offset = 0x4, fixed_abs, tag = 'smem constant byte address 0x4 - core index']
  #allocation1 [shape = 'u32[72,128]{1,0:T(1,128)}', space=vmem, size = 0x9000, scoped, tag = 'internal scratch']
  %s0 = inlined_call_operand.hbm [shape: f32[13,1536], index: 0, kind: input, shape index: {}]
  %s1 = inlined_call_operand.hbm [shape: f32[6,1536], index: 1, kind: input, shape index: {}]
  %s2 = inlined_call_operand.hbm [shape: f32[2,1536], index: 2, kind: input, shape index: {}]
  %s3 = inlined_call_operand.hbm [shape: f32[8,1536], index: 3, kind: output, shape index: {}]
  %s4 = sld [smem:[#allocation0]]
  $region38: #{tpu_custom_call.1} parent=0
    _
  %s6 = ssub.s32 1, %s4
  %s7 = scalar_select 0, %s6, %s4
  $region1: #{tpu_custom_call.1} parent=0
    #allocation2 [shape = 'u8[98304]{0}', space=vmem, size = 0x18000, scoped, tag = 'input window, operand 0, single buffered']
    #allocation3 [shape = 's32[1]{0}', space=sflag, size = 0x4, scoped, tag = 'scoped memory for tpu_custom_call.1']
    #allocation4 [shape = 's32[1]{0}', space=sflag, size = 0x4, scoped, tag = 'scoped memory for tpu_custom_call.1']
    #allocation5 [shape = 'u8[49152]{0}', space=vmem, size = 0xc000, scoped, tag = 'input window, operand 1, single buffered']
    #allocation6 [shape = 's32[1]{0}', space=sflag, size = 0x4, scoped, tag = 'scoped memory for tpu_custom_call.1']
    #allocation7 [shape = 'u8[12288]{0}', space=vmem, size = 0x3000, scoped, tag = 'input window, operand 2, single buffered']
    #allocation8 [shape = 'u8[49152]{0}', space=vmem, size = 0xc000, scoped, tag = 'output window, operand 0, single buffered']
    %8 = vsyncpa [#allocation3], 0
    %9 = vsyncpa [#allocation6], 0
    %10 = vsyncpa [#allocation4], 0
    // Predicated region
    $region2: #{tpu_custom_call.1} parent=1 // pred_check
      _
    $region3: #{tpu_custom_call.1} parent=1 // pred_check_branch
      %12 = sbr.rel (0) target = $region5
    $region4: #{tpu_custom_call.1} parent=1 // pred_region
      %14 = vsyncadd [#allocation3], 0
      %s15 = sshll.u32 %s0, 4
      %s16 = int_to_ptr.hbm [resolvable:$true] %s15
      %s17 = sshll.u32 [#allocation2], 4
      %s18 = int_to_ptr.vmem [resolvable:$true] %s17
      %23 = dma.hbm_to_vmem [thread:$0]  %s16, 3072, %s18, [#allocation3], 1536, 1536, 96
    $region5: #{tpu_custom_call.1} parent=1 // pred_fallthru
      _
    // Predicated region
    $region6: #{tpu_custom_call.1} parent=1 // pred_check
      _
    $region7: #{tpu_custom_call.1} parent=1 // pred_check_branch
      %25 = sbr.rel (0) target = $region9
    $region8: #{tpu_custom_call.1} parent=1 // pred_region
      %27 = vsyncadd [#allocation6], 0
      %s29 = sshll.u32 %s1, 4
      %s30 = int_to_ptr.hbm [resolvable:$true] %s29
      %s31 = sshll.u32 [#allocation5], 4
      %s32 = int_to_ptr.vmem [resolvable:$true] %s31
      %34 = dma.hbm_to_vmem [thread:$0]  %s30, 1536, %s32, [#allocation6]
    $region9: #{tpu_custom_call.1} parent=1 // pred_fallthru
      _
    // Predicated region
    $region10: #{tpu_custom_call.1} parent=1 // pred_check
      _
    $region11: #{tpu_custom_call.1} parent=1 // pred_check_branch
      %36 = sbr.rel (0) target = $region13
    $region12: #{tpu_custom_call.1} parent=1 // pred_region
      %38 = vsyncadd [#allocation6], 0
      %s40 = sshll.u32 %s2, 4
      %s41 = int_to_ptr.hbm [resolvable:$true] %s40
      %s42 = sshll.u32 [#allocation7], 4
      %s43 = int_to_ptr.vmem [resolvable:$true] %s42
      %45 = dma.hbm_to_vmem [thread:$0]  %s41, 384, %s43, [#allocation6]
    $region13: #{tpu_custom_call.1} parent=1 // pred_fallthru
      _
    // Predicated region
    $region14: #{tpu_custom_call.1} parent=1 // pred_check
      _
    $region15: #{tpu_custom_call.1} parent=1 // pred_check_branch
      %47 = sbr.rel (0) target = $region17
    $region16: #{tpu_custom_call.1} parent=1 // pred_region
      %49 = dma.done [#allocation3], 3072
    $region17: #{tpu_custom_call.1} parent=1 // pred_fallthru
      _
    // Predicated region
    $region18: #{tpu_custom_call.1} parent=1 // pred_check
      _
    $region19: #{tpu_custom_call.1} parent=1 // pred_check_branch
      %51 = sbr.rel (0) target = $region21
    $region20: #{tpu_custom_call.1} parent=1 // pred_region
      %53 = dma.done [#allocation6], 1536
    $region21: #{tpu_custom_call.1} parent=1 // pred_fallthru
      _
    // Predicated region
    $region22: #{tpu_custom_call.1} parent=1 // pred_check
      _
    $region23: #{tpu_custom_call.1} parent=1 // pred_check_branch
      %55 = sbr.rel (0) target = $region25
    $region24: #{tpu_custom_call.1} parent=1 // pred_region
      %57 = dma.done [#allocation6], 384
    $region25: #{tpu_custom_call.1} parent=1 // pred_fallthru
      _
    %p58 = scmp.eq.s32.totalorder 0, 0
    // Predicated region
    $region26: #{tpu_custom_call.1} parent=1 // pred_check
      %p59 = pneg %p58
    $region27: #{tpu_custom_call.1} parent=1 // pred_check_branch
      %61 = sbr.rel (%p59) target = $region29
    $region28: #{tpu_custom_call.1} parent=1 // pred_region
      %62 = vst [vmem:[#allocation8] sm:$0xff] 0.0
      %63 = vst [vmem:[#allocation8 + $0x8] sm:$0xff] 0.0
      %64 = vst [vmem:[#allocation8 + $0x10] sm:$0xff] 0.0
      %65 = vst [vmem:[#allocation8 + $0x18] sm:$0xff] 0.0
      %66 = vst [vmem:[#allocation8 + $0x20] sm:$0xff] 0.0
      %67 = vst [vmem:[#allocation8 + $0x28] sm:$0xff] 0.0
      %68 = vst [vmem:[#allocation8 + $0x30] sm:$0xff] 0.0
      %69 = vst [vmem:[#allocation8 + $0x38] sm:$0xff] 0.0
      %70 = vst [vmem:[#allocation8 + $0x40] sm:$0xff] 0.0
      %71 = vst [vmem:[#allocation8 + $0x48] sm:$0xff] 0.0
      %72 = vst [vmem:[#allocation8 + $0x50] sm:$0xff] 0.0
      %73 = vst [vmem:[#allocation8 + $0x58] sm:$0xff] 0.0
    $region29: #{tpu_custom_call.1} parent=1 // pred_fallthru
      _
    %v74 = vld [vmem:[#allocation2] ss:$8 sm:$0xf]
    %v75 = vld [vmem:[#allocation2] ss:$8 sm:$0xf0]
    %v76 = vor.u32 %v74, %v75
    %s77 = scalar_lea.vmem [#allocation2], 64
    %v78 = vld [vmem:[%s77] ss:$8 sm:$0xf]
    %v79 = vld [vmem:[#allocation2] sm:$0x6]
    %v80 = vld [vmem:[#allocation2 + $0x8] sm:$0x6]
    %v81 = vld [vmem:[#allocation2 + $0x10] sm:$0x6]
    %v82 = vld [vmem:[#allocation2 + $0x18] sm:$0x6]
    %v83 = vld [vmem:[#allocation2 + $0x20] sm:$0x6]
    %v84 = vld [vmem:[#allocation2 + $0x28] sm:$0x6]
    %v85 = vld [vmem:[#allocation2 + $0x30] sm:$0x6]
    %v86 = vld [vmem:[#allocation2 + $0x38] sm:$0x6]
    %v87 = vld [vmem:[#allocation2 + $0x40] sm:$0x6]
    %v88 = vld [vmem:[#allocation2 + $0x48] sm:$0x6]
    %v89 = vld [vmem:[#allocation2 + $0x50] sm:$0x6]
    %v90 = vld [vmem:[#allocation2 + $0x58] sm:$0x6]
    %v91 = vld [vmem:[#allocation2] sm:$0x18]
    %v92 = vld [vmem:[#allocation2 + $0x8] sm:$0x18]
    %v93 = vld [vmem:[#allocation2 + $0x10] sm:$0x18]
    %v94 = vld [vmem:[#allocation2 + $0x18] sm:$0x18]
    %v95 = vld [vmem:[#allocation2 + $0x20] sm:$0x18]
    %v96 = vld [vmem:[#allocation2 + $0x28] sm:$0x18]
    %v97 = vld [vmem:[#allocation2 + $0x30] sm:$0x18]
    %v98 = vld [vmem:[#allocation2 + $0x38] sm:$0x18]
    %v99 = vld [vmem:[#allocation2 + $0x40] sm:$0x18]
    %v100 = vld [vmem:[#allocation2 + $0x48] sm:$0x18]
    %v101 = vld [vmem:[#allocation2 + $0x50] sm:$0x18]
    %v102 = vld [vmem:[#allocation2 + $0x58] sm:$0x18]
    %v103 = vld [vmem:[#allocation2] sm:$0xe0]
    %v104 = vld [vmem:[#allocation2 + $0x8] sm:$0xe0]
    %v105 = vld [vmem:[#allocation2 + $0x10] sm:$0xe0]
    %v106 = vld [vmem:[#allocation2 + $0x18] sm:$0xe0]
    %v107 = vld [vmem:[#allocation2 + $0x20] sm:$0xe0]
    %v108 = vld [vmem:[#allocation2 + $0x28] sm:$0xe0]
    %v109 = vld [vmem:[#allocation2 + $0x30] sm:$0xe0]
    %v110 = vld [vmem:[#allocation2 + $0x38] sm:$0xe0]
    %v111 = vld [vmem:[#allocation2 + $0x40] sm:$0xe0]
    %v112 = vld [vmem:[#allocation2 + $0x48] sm:$0xe0]
    %v113 = vld [vmem:[#allocation2 + $0x50] sm:$0xe0]
    %v114 = vld [vmem:[#allocation2 + $0x58] sm:$0xe0]
    %v115 = vld [vmem:[#allocation2 + $0x60] sm:$0x1f]
    %v116 = vld [vmem:[#allocation2 + $0x68] sm:$0x1f]
    %v117 = vld [vmem:[#allocation2 + $0x70] sm:$0x1f]
    %v118 = vld [vmem:[#allocation2 + $0x78] sm:$0x1f]
    %v119 = vld [vmem:[#allocation2 + $0x80] sm:$0x1f]
    %v120 = vld [vmem:[#allocation2 + $0x88] sm:$0x1f]
    %v121 = vld [vmem:[#allocation2 + $0x90] sm:$0x1f]
    %v122 = vld [vmem:[#allocation2 + $0x98] sm:$0x1f]
    %v123 = vld [vmem:[#allocation2 + $0xa0] sm:$0x1f]
    %v124 = vld [vmem:[#allocation2 + $0xa8] sm:$0x1f]
    %v125 = vld [vmem:[#allocation2 + $0xb0] sm:$0x1f]
    %v126 = vld [vmem:[#allocation2 + $0xb8] sm:$0x1f]
    %v127 = vld [vmem:[#allocation5] ss:$8 sm:$0xf]
    %v128 = vld [vmem:[#allocation5] ss:$8 sm:$0xf0]
    %v129 = vor.u32 %v127, %v128
    %s130 = scalar_lea.vmem [#allocation5], 64
    %v131 = vld [vmem:[%s130] ss:$8 sm:$0xf]
    %v132 = vld [vmem:[#allocation5] sm:$0x6]
    %v133 = vld [vmem:[#allocation5 + $0x8] sm:$0x6]
    %v134 = vld [vmem:[#allocation5 + $0x10] sm:$0x6]
    %v135 = vld [vmem:[#allocation5 + $0x18] sm:$0x6]
    %v136 = vld [vmem:[#allocation5 + $0x20] sm:$0x6]
    %v137 = vld [vmem:[#allocation5 + $0x28] sm:$0x6]
    %v138 = vld [vmem:[#allocation5 + $0x30] sm:$0x6]
    %v139 = vld [vmem:[#allocation5 + $0x38] sm:$0x6]
    %v140 = vld [vmem:[#allocation5 + $0x40] sm:$0x6]
    %v141 = vld [vmem:[#allocation5 + $0x48] sm:$0x6]
    %v142 = vld [vmem:[#allocation5 + $0x50] sm:$0x6]
    %v143 = vld [vmem:[#allocation5 + $0x58] sm:$0x6]
    %v144 = vld [vmem:[#allocation5] sm:$0x18]
    %v145 = vld [vmem:[#allocation5 + $0x8] sm:$0x18]
    %v146 = vld [vmem:[#allocation5 + $0x10] sm:$0x18]
    %v147 = vld [vmem:[#allocation5 + $0x18] sm:$0x18]
    %v148 = vld [vmem:[#allocation5 + $0x20] sm:$0x18]
    %v149 = vld [vmem:[#allocation5 + $0x28] sm:$0x18]
    %v150 = vld [vmem:[#allocation5 + $0x30] sm:$0x18]
    %v151 = vld [vmem:[#allocation5 + $0x38] sm:$0x18]
    %v152 = vld [vmem:[#allocation5 + $0x40] sm:$0x18]
    %v153 = vld [vmem:[#allocation5 + $0x48] sm:$0x18]
    %v154 = vld [vmem:[#allocation5 + $0x50] sm:$0x18]
    %v155 = vld [vmem:[#allocation5 + $0x58] sm:$0x18]
    %s156 = scalar_lea.vmem [#allocation5], 5
    %v157 = vld [vmem:[%s156] ss:$8 sm:$0xf]
    %v158 = vld [vmem:[%s156] ss:$8 sm:$0xf0]
    %v159 = vor.u32 %v157, %v158
    %s160 = scalar_lea.vmem [#allocation5], 69
    %v161 = vld [vmem:[%s160] ss:$8 sm:$0xf]
    %v162 = vld [vmem:[#allocation7] sm:$0xff]
    %v163 = vld [vmem:[#allocation7 + $0x8] sm:$0xff]
    %v164 = vld [vmem:[#allocation7 + $0x10] sm:$0xff]
    %vm165 = vcmp.eq.f32.partialorder %v129, 1.0
    %vm166 = vcmp.eq.f32.partialorder %v131, 1.0
    %vm167 = vcmp.eq.f32.partialorder %v129, 0.0
    %vm168 = vcmp.eq.f32.partialorder %v131, 0.0
    %v169 = vmax.f32 %v76, 0.0
    %v170 = vmax.f32 %v78, 0.0
    %v171 = vmul.f32 %v76, %v129
    %v172 = vmul.f32 %v78, %v131
    %v173 = vsub.f32 %v169, %v171
    %v174 = vsub.f32 %v170, %v172
    %v175 = vand.u32 2147483647, %v76
    %v176 = vand.u32 2147483647, %v78
    %v177 = vsub.f32 0.0, %v175
    %v178 = vsub.f32 0.0, %v176
    %v179 = vmul.f32 %v177, 1.442695
    %v180 = vpow.pop %v179
    %v181 = vmul.f32 %v178, 1.442695
    %v182 = vpow.pop %v181
    %v183 = vadd.f32 %v180, 1.0
    %v184 = vadd.f32 %v182, 1.0
    %v185 = vlog2.pop %v183
    %v186 = vmul.f32 %v185, 0.6931472
    %v187 = vlog2.pop %v184
    %v188 = vmul.f32 %v187, 0.6931472
    %v189 = vadd.f32 %v173, %v186
    %v190 = vadd.f32 %v174, %v188
    %v191 = vsub.f32 0.0, %v79
    %v192 = vsub.f32 0.0, %v80
    %v193 = vsub.f32 0.0, %v81
    %v194 = vsub.f32 0.0, %v82
    %v195 = vsub.f32 0.0, %v83
    %v196 = vsub.f32 0.0, %v84
    %v197 = vsub.f32 0.0, %v85
    %v198 = vsub.f32 0.0, %v86
    %v199 = vsub.f32 0.0, %v87
    %v200 = vsub.f32 0.0, %v88
    %v201 = vsub.f32 0.0, %v89
    %v202 = vsub.f32 0.0, %v90
    %v203 = vmul.f32 %v191, 1.442695
    %v204 = vpow.pop %v203
    %v205 = vmul.f32 %v192, 1.442695
    %v206 = vpow.pop %v205
    %v207 = vmul.f32 %v193, 1.442695
    %v208 = vpow.pop %v207
    %v209 = vmul.f32 %v194, 1.442695
    %v210 = vpow.pop %v209
    %v211 = vmul.f32 %v195, 1.442695
    %v212 = vpow.pop %v211
    %v213 = vmul.f32 %v196, 1.442695
    %v214 = vpow.pop %v213
    %v215 = vmul.f32 %v197, 1.442695
    %v216 = vpow.pop %v215
    %v217 = vmul.f32 %v198, 1.442695
    %v218 = vpow.pop %v217
    %v219 = vmul.f32 %v199, 1.442695
    %v220 = vpow.pop %v219
    %v221 = vmul.f32 %v200, 1.442695
    %v222 = vpow.pop %v221
    %v223 = vmul.f32 %v201, 1.442695
    %v224 = vpow.pop %v223
    %v225 = vmul.f32 %v202, 1.442695
    %v226 = vpow.pop %v225
    %v227 = vadd.f32 %v204, 1.0
    %v228 = vadd.f32 %v206, 1.0
    %v229 = vadd.f32 %v208, 1.0
    %v230 = vadd.f32 %v210, 1.0
    %v231 = vadd.f32 %v212, 1.0
    %v232 = vadd.f32 %v214, 1.0
    %v233 = vadd.f32 %v216, 1.0
    %v234 = vadd.f32 %v218, 1.0
    %v235 = vadd.f32 %v220, 1.0
    %v236 = vadd.f32 %v222, 1.0
    %v237 = vadd.f32 %v224, 1.0
    %v238 = vadd.f32 %v226, 1.0
    %v239 = vrcp.pop %v227
    %v240 = vmul.f32 %v227, %v239
    %v241 = vsub.f32 1.0, %v240
    %v242 = vmul.f32 %v239, %v241
    %v243 = vadd.f32 %v239, %v242
    %vm244 = vweird.f32 %v227
    %vm245 = vweird.f32 %v239
    %vm246 = vmor %vm244, %vm245
    %v247 = vsel %vm246, %v239, %v243
    %v248 = vand.u32 2147483647, %v227
    %vm249 = vcmp.eq.f32.partialorder %v248, 8.507059e+37
    %v250 = vand.u32 %v227, 2147483648
    %v251 = vor.u32 1.1754944e-38, %v250
    %v252 = vsel %vm249, %v251, %v247
    %v253 = vmul.f32 1.0, %v252
    %v254 = vrcp.pop %v228
    %v255 = vmul.f32 %v228, %v254
    %v256 = vsub.f32 1.0, %v255
    %v257 = vmul.f32 %v254, %v256
    %v258 = vadd.f32 %v254, %v257
    %vm259 = vweird.f32 %v228
    %vm260 = vweird.f32 %v254
    %vm261 = vmor %vm259, %vm260
    %v262 = vsel %vm261, %v254, %v258
    %v263 = vand.u32 2147483647, %v228
    %vm264 = vcmp.eq.f32.partialorder %v263, 8.507059e+37
    %v265 = vand.u32 %v228, 2147483648
    %v266 = vor.u32 1.1754944e-38, %v265
    %v267 = vsel %vm264, %v266, %v262
    %v268 = vmul.f32 1.0, %v267
    %v269 = vrcp.pop %v229
    %v270 = vmul.f32 %v229, %v269
    %v271 = vsub.f32 1.0, %v270
    %v272 = vmul.f32 %v269, %v271
    %v273 = vadd.f32 %v269, %v272
    %vm274 = vweird.f32 %v229
    %vm275 = vweird.f32 %v269
    %vm276 = vmor %vm274, %vm275
    %v277 = vsel %vm276, %v269, %v273
    %v278 = vand.u32 2147483647, %v229
    %vm279 = vcmp.eq.f32.partialorder %v278, 8.507059e+37
    %v280 = vand.u32 %v229, 2147483648
    %v281 = vor.u32 1.1754944e-38, %v280
    %v282 = vsel %vm279, %v281, %v277
    %v283 = vmul.f32 1.0, %v282
    %v284 = vrcp.pop %v230
    %v285 = vmul.f32 %v230, %v284
    %v286 = vsub.f32 1.0, %v285
    %v287 = vmul.f32 %v284, %v286
    %v288 = vadd.f32 %v284, %v287
    %vm289 = vweird.f32 %v230
    %vm290 = vweird.f32 %v284
    %vm291 = vmor %vm289, %vm290
    %v292 = vsel %vm291, %v284, %v288
    %v293 = vand.u32 2147483647, %v230
    %vm294 = vcmp.eq.f32.partialorder %v293, 8.507059e+37
    %v295 = vand.u32 %v230, 2147483648
    %v296 = vor.u32 1.1754944e-38, %v295
    %v297 = vsel %vm294, %v296, %v292
    %v298 = vmul.f32 1.0, %v297
    %v299 = vrcp.pop %v231
    %v300 = vmul.f32 %v231, %v299
    %v301 = vsub.f32 1.0, %v300
    %v302 = vmul.f32 %v299, %v301
    %v303 = vadd.f32 %v299, %v302
    %vm304 = vweird.f32 %v231
    %vm305 = vweird.f32 %v299
    %vm306 = vmor %vm304, %vm305
    %v307 = vsel %vm306, %v299, %v303
    %v308 = vand.u32 2147483647, %v231
    %vm309 = vcmp.eq.f32.partialorder %v308, 8.507059e+37
    %v310 = vand.u32 %v231, 2147483648
    %v311 = vor.u32 1.1754944e-38, %v310
    %v312 = vsel %vm309, %v311, %v307
    %v313 = vmul.f32 1.0, %v312
    %v314 = vrcp.pop %v232
    %v315 = vmul.f32 %v232, %v314
    %v316 = vsub.f32 1.0, %v315
    %v317 = vmul.f32 %v314, %v316
    %v318 = vadd.f32 %v314, %v317
    %vm319 = vweird.f32 %v232
    %vm320 = vweird.f32 %v314
    %vm321 = vmor %vm319, %vm320
    %v322 = vsel %vm321, %v314, %v318
    %v323 = vand.u32 2147483647, %v232
    %vm324 = vcmp.eq.f32.partialorder %v323, 8.507059e+37
    %v325 = vand.u32 %v232, 2147483648
    %v326 = vor.u32 1.1754944e-38, %v325
    %v327 = vsel %vm324, %v326, %v322
    %v328 = vmul.f32 1.0, %v327
    %v329 = vrcp.pop %v233
    %v330 = vmul.f32 %v233, %v329
    %v331 = vsub.f32 1.0, %v330
    %v332 = vmul.f32 %v329, %v331
    %v333 = vadd.f32 %v329, %v332
    %vm334 = vweird.f32 %v233
    %vm335 = vweird.f32 %v329
    %vm336 = vmor %vm334, %vm335
    %v337 = vsel %vm336, %v329, %v333
    %v338 = vand.u32 2147483647, %v233
    %vm339 = vcmp.eq.f32.partialorder %v338, 8.507059e+37
    %v340 = vand.u32 %v233, 2147483648
    %v341 = vor.u32 1.1754944e-38, %v340
    %v342 = vsel %vm339, %v341, %v337
    %v343 = vmul.f32 1.0, %v342
    %v344 = vrcp.pop %v234
    %v345 = vmul.f32 %v234, %v344
    %v346 = vsub.f32 1.0, %v345
    %v347 = vmul.f32 %v344, %v346
    %v348 = vadd.f32 %v344, %v347
    %vm349 = vweird.f32 %v234
    %vm350 = vweird.f32 %v344
    %vm351 = vmor %vm349, %vm350
    %v352 = vsel %vm351, %v344, %v348
    %v353 = vand.u32 2147483647, %v234
    %vm354 = vcmp.eq.f32.partialorder %v353, 8.507059e+37
    %v355 = vand.u32 %v234, 2147483648
    %v356 = vor.u32 1.1754944e-38, %v355
    %v357 = vsel %vm354, %v356, %v352
    %v358 = vmul.f32 1.0, %v357
    %v359 = vrcp.pop %v235
    %v360 = vmul.f32 %v235, %v359
    %v361 = vsub.f32 1.0, %v360
    %v362 = vmul.f32 %v359, %v361
    %v363 = vadd.f32 %v359, %v362
    %vm364 = vweird.f32 %v235
    %vm365 = vweird.f32 %v359
    %vm366 = vmor %vm364, %vm365
    %v367 = vsel %vm366, %v359, %v363
    %v368 = vand.u32 2147483647, %v235
    %vm369 = vcmp.eq.f32.partialorder %v368, 8.507059e+37
    %v370 = vand.u32 %v235, 2147483648
    %v371 = vor.u32 1.1754944e-38, %v370
    %v372 = vsel %vm369, %v371, %v367
    %v373 = vmul.f32 1.0, %v372
    %v374 = vrcp.pop %v236
    %v375 = vmul.f32 %v236, %v374
    %v376 = vsub.f32 1.0, %v375
    %v377 = vmul.f32 %v374, %v376
    %v378 = vadd.f32 %v374, %v377
    %vm379 = vweird.f32 %v236
    %vm380 = vweird.f32 %v374
    %vm381 = vmor %vm379, %vm380
    %v382 = vsel %vm381, %v374, %v378
    %v383 = vand.u32 2147483647, %v236
    %vm384 = vcmp.eq.f32.partialorder %v383, 8.507059e+37
    %v385 = vand.u32 %v236, 2147483648
    %v386 = vor.u32 1.1754944e-38, %v385
    %v387 = vsel %vm384, %v386, %v382
    %v388 = vmul.f32 1.0, %v387
    %v389 = vrcp.pop %v237
    %v390 = vmul.f32 %v237, %v389
    %v391 = vsub.f32 1.0, %v390
    %v392 = vmul.f32 %v389, %v391
    %v393 = vadd.f32 %v389, %v392
    %vm394 = vweird.f32 %v237
    %vm395 = vweird.f32 %v389
    %vm396 = vmor %vm394, %vm395
    %v397 = vsel %vm396, %v389, %v393
    %v398 = vand.u32 2147483647, %v237
    %vm399 = vcmp.eq.f32.partialorder %v398, 8.507059e+37
    %v400 = vand.u32 %v237, 2147483648
    %v401 = vor.u32 1.1754944e-38, %v400
    %v402 = vsel %vm399, %v401, %v397
    %v403 = vmul.f32 1.0, %v402
    %v404 = vrcp.pop %v238
    %v405 = vmul.f32 %v238, %v404
    %v406 = vsub.f32 1.0, %v405
    %v407 = vmul.f32 %v404, %v406
    %v408 = vadd.f32 %v404, %v407
    %vm409 = vweird.f32 %v238
    %vm410 = vweird.f32 %v404
    %vm411 = vmor %vm409, %vm410
    %v412 = vsel %vm411, %v404, %v408
    %v413 = vand.u32 2147483647, %v238
    %vm414 = vcmp.eq.f32.partialorder %v413, 8.507059e+37
    %v415 = vand.u32 %v238, 2147483648
    %v416 = vor.u32 1.1754944e-38, %v415
    %v417 = vsel %vm414, %v416, %v412
    %v418 = vmul.f32 1.0, %v417
    %v419 = vmul.f32 %v91, 1.442695
    %v420 = vpow.pop %v419
    %v421 = vmul.f32 %v92, 1.442695
    %v422 = vpow.pop %v421
    %v423 = vmul.f32 %v93, 1.442695
    %v424 = vpow.pop %v423
    %v425 = vmul.f32 %v94, 1.442695
    %v426 = vpow.pop %v425
    %v427 = vmul.f32 %v95, 1.442695
    %v428 = vpow.pop %v427
    %v429 = vmul.f32 %v96, 1.442695
    %v430 = vpow.pop %v429
    %v431 = vmul.f32 %v97, 1.442695
    %v432 = vpow.pop %v431
    %v433 = vmul.f32 %v98, 1.442695
    %v434 = vpow.pop %v433
    %v435 = vmul.f32 %v99, 1.442695
    %v436 = vpow.pop %v435
    %v437 = vmul.f32 %v100, 1.442695
    %v438 = vpow.pop %v437
    %v439 = vmul.f32 %v101, 1.442695
    %v440 = vpow.pop %v439
    %v441 = vmul.f32 %v102, 1.442695
    %v442 = vpow.pop %v441
    %446 = vst [vmem:[#allocation1] ss:$4 sm:$0xff] %v162
    %s447 = scalar_lea.vmem [#allocation1], 32
    %448 = vst [vmem:[%s447] ss:$4 sm:$0xff] %v163
    %v449 = vld.sshfl [vmem:[#allocation1] sm:$0xff pattern:$0x73625140]
    %v450 = vld.sshfl [vmem:[#allocation1 + $0x8] sm:$0xff pattern:$0x73625140]
    %v451 = vld.sshfl [vmem:[#allocation1 + $0x10] sm:$0xff pattern:$0x73625140]
    %v452 = vld.sshfl [vmem:[#allocation1 + $0x18] sm:$0xff pattern:$0x73625140]
    %v453 = vld.sshfl [vmem:[#allocation1 + $0x20] sm:$0xff pattern:$0x73625140]
    %v454 = vld.sshfl [vmem:[#allocation1 + $0x28] sm:$0xff pattern:$0x73625140]
    %v455 = vld.sshfl [vmem:[#allocation1 + $0x30] sm:$0xff pattern:$0x73625140]
    %v456 = vld.sshfl [vmem:[#allocation1 + $0x38] sm:$0xff pattern:$0x73625140]
    %457 = vst [vmem:[#allocation1] ss:$4 sm:$0xff] %v164
    %v458 = vld.sshfl [vmem:[#allocation1] sm:$0xff pattern:$0x73625140]
    %v459 = vld.sshfl [vmem:[#allocation1 + $0x8] sm:$0xff pattern:$0x73625140]
    %v460 = vld.sshfl [vmem:[#allocation1 + $0x10] sm:$0xff pattern:$0x73625140]
    %v461 = vld.sshfl [vmem:[#allocation1 + $0x18] sm:$0xff pattern:$0x73625140]
    %v462 = vrot.slane %v449, 5
    %v463 = vrot.slane %v450, 5
    %v464 = vrot.slane %v451, 5
    %v465 = vrot.slane %v452, 5
    %v466 = vrot.slane %v453, 5
    %v467 = vrot.slane %v454, 5
    %v468 = vrot.slane %v455, 5
    %v469 = vrot.slane %v456, 5
    %v470 = vrot.slane %v458, 5
    %v471 = vrot.slane %v459, 5
    %v472 = vrot.slane %v460, 5
    %v473 = vrot.slane %v461, 5
    %v486 = vmul.f32 %v420, %v462
    %v487 = vmul.f32 %v422, %v463
    %v488 = vmul.f32 %v424, %v464
    %v489 = vmul.f32 %v426, %v465
    %v490 = vmul.f32 %v428, %v466
    %v491 = vmul.f32 %v430, %v467
    %v492 = vmul.f32 %v432, %v468
    %v493 = vmul.f32 %v434, %v469
    %v494 = vmul.f32 %v436, %v470
    %v495 = vmul.f32 %v438, %v471
    %v496 = vmul.f32 %v440, %v472
    %v497 = vmul.f32 %v442, %v473
    %v498 = vmul.f32 %v486, 0.5
    %v499 = vmul.f32 %v487, 0.5
    %v500 = vmul.f32 %v488, 0.5
    %v501 = vmul.f32 %v489, 0.5
    %v502 = vmul.f32 %v490, 0.5
    %v503 = vmul.f32 %v491, 0.5
    %v504 = vmul.f32 %v492, 0.5
    %v505 = vmul.f32 %v493, 0.5
    %v506 = vmul.f32 %v494, 0.5
    %v507 = vmul.f32 %v495, 0.5
    %v508 = vmul.f32 %v496, 0.5
    %v509 = vmul.f32 %v497, 0.5
    %v522 = vrot.slane %v498, 2
    %v523 = vrot.slane %v499, 2
    %v524 = vrot.slane %v500, 2
    %v525 = vrot.slane %v501, 2
    %v526 = vrot.slane %v502, 2
    %v527 = vrot.slane %v503, 2
    %v528 = vrot.slane %v504, 2
    %v529 = vrot.slane %v505, 2
    %v530 = vrot.slane %v506, 2
    %v531 = vrot.slane %v507, 2
    %v532 = vrot.slane %v508, 2
    %v533 = vrot.slane %v509, 2
    %v546 = vsub.f32 %v253, %v522
    %v547 = vsub.f32 %v268, %v523
    %v548 = vsub.f32 %v283, %v524
    %v549 = vsub.f32 %v298, %v525
    %v550 = vsub.f32 %v313, %v526
    %v551 = vsub.f32 %v328, %v527
    %v552 = vsub.f32 %v343, %v528
    %v553 = vsub.f32 %v358, %v529
    %v554 = vsub.f32 %v373, %v530
    %v555 = vsub.f32 %v388, %v531
    %v556 = vsub.f32 %v403, %v532
    %v557 = vsub.f32 %v418, %v533
    %v558 = vadd.f32 %v253, %v522
    %v559 = vadd.f32 %v268, %v523
    %v560 = vadd.f32 %v283, %v524
    %v561 = vadd.f32 %v298, %v525
    %v562 = vadd.f32 %v313, %v526
    %v563 = vadd.f32 %v328, %v527
    %v564 = vadd.f32 %v343, %v528
    %v565 = vadd.f32 %v358, %v529
    %v566 = vadd.f32 %v373, %v530
    %v567 = vadd.f32 %v388, %v531
    %v568 = vadd.f32 %v403, %v532
    %v569 = vadd.f32 %v418, %v533
    %v570 = vmul.f32 %v144, 0.5
    %v571 = vmul.f32 %v145, 0.5
    %v572 = vmul.f32 %v146, 0.5
    %v573 = vmul.f32 %v147, 0.5
    %v574 = vmul.f32 %v148, 0.5
    %v575 = vmul.f32 %v149, 0.5
    %v576 = vmul.f32 %v150, 0.5
    %v577 = vmul.f32 %v151, 0.5
    %v578 = vmul.f32 %v152, 0.5
    %v579 = vmul.f32 %v153, 0.5
    %v580 = vmul.f32 %v154, 0.5
    %v581 = vmul.f32 %v155, 0.5
    %v594 = vrot.slane %v570, 2
    %v595 = vrot.slane %v571, 2
    %v596 = vrot.slane %v572, 2
    %v597 = vrot.slane %v573, 2
    %v598 = vrot.slane %v574, 2
    %v599 = vrot.slane %v575, 2
    %v600 = vrot.slane %v576, 2
    %v601 = vrot.slane %v577, 2
    %v602 = vrot.slane %v578, 2
    %v603 = vrot.slane %v579, 2
    %v604 = vrot.slane %v580, 2
    %v605 = vrot.slane %v581, 2
    %v618 = vsub.f32 %v132, %v594
    %v619 = vsub.f32 %v133, %v595
    %v620 = vsub.f32 %v134, %v596
    %v621 = vsub.f32 %v135, %v597
    %v622 = vsub.f32 %v136, %v598
    %v623 = vsub.f32 %v137, %v599
    %v624 = vsub.f32 %v138, %v600
    %v625 = vsub.f32 %v139, %v601
    %v626 = vsub.f32 %v140, %v602
    %v627 = vsub.f32 %v141, %v603
    %v628 = vsub.f32 %v142, %v604
    %v629 = vsub.f32 %v143, %v605
    %v630 = vadd.f32 %v132, %v594
    %v631 = vadd.f32 %v133, %v595
    %v632 = vadd.f32 %v134, %v596
    %v633 = vadd.f32 %v135, %v597
    %v634 = vadd.f32 %v136, %v598
    %v635 = vadd.f32 %v137, %v599
    %v636 = vadd.f32 %v138, %v600
    %v637 = vadd.f32 %v139, %v601
    %v638 = vadd.f32 %v140, %v602
    %v639 = vadd.f32 %v141, %v603
    %v640 = vadd.f32 %v142, %v604
    %v641 = vadd.f32 %v143, %v605
    %v642 = vmin.f32 %v558, %v630
    %v643 = vmin.f32 %v559, %v631
    %v644 = vmin.f32 %v560, %v632
    %v645 = vmin.f32 %v561, %v633
    %v646 = vmin.f32 %v562, %v634
    %v647 = vmin.f32 %v563, %v635
    %v648 = vmin.f32 %v564, %v636
    %v649 = vmin.f32 %v565, %v637
    %v650 = vmin.f32 %v566, %v638
    %v651 = vmin.f32 %v567, %v639
    %v652 = vmin.f32 %v568, %v640
    %v653 = vmin.f32 %v569, %v641
    %v654 = vmax.f32 %v546, %v618
    %v655 = vmax.f32 %v547, %v619
    %v656 = vmax.f32 %v548, %v620
    %v657 = vmax.f32 %v549, %v621
    %v658 = vmax.f32 %v550, %v622
    %v659 = vmax.f32 %v551, %v623
    %v660 = vmax.f32 %v552, %v624
    %v661 = vmax.f32 %v553, %v625
    %v662 = vmax.f32 %v554, %v626
    %v663 = vmax.f32 %v555, %v627
    %v664 = vmax.f32 %v556, %v628
    %v665 = vmax.f32 %v557, %v629
    %v666 = vsub.f32 %v642, %v654
    %v667 = vsub.f32 %v643, %v655
    %v668 = vsub.f32 %v644, %v656
    %v669 = vsub.f32 %v645, %v657
    %v670 = vsub.f32 %v646, %v658
    %v671 = vsub.f32 %v647, %v659
    %v672 = vsub.f32 %v648, %v660
    %v673 = vsub.f32 %v649, %v661
    %v674 = vsub.f32 %v650, %v662
    %v675 = vsub.f32 %v651, %v663
    %v676 = vsub.f32 %v652, %v664
    %v677 = vsub.f32 %v653, %v665
    %v678 = vmax.f32 %v666, 0.0
    %v679 = vmax.f32 %v667, 0.0
    %v680 = vmax.f32 %v668, 0.0
    %v681 = vmax.f32 %v669, 0.0
    %v682 = vmax.f32 %v670, 0.0
    %v683 = vmax.f32 %v671, 0.0
    %v684 = vmax.f32 %v672, 0.0
    %v685 = vmax.f32 %v673, 0.0
    %v686 = vmax.f32 %v674, 0.0
    %v687 = vmax.f32 %v675, 0.0
    %v688 = vmax.f32 %v676, 0.0
    %v689 = vmax.f32 %v677, 0.0
    %v702 = vrot.slane %v678, 1
    %v703 = vrot.slane %v679, 1
    %v704 = vrot.slane %v680, 1
    %v705 = vrot.slane %v681, 1
    %v706 = vrot.slane %v682, 1
    %v707 = vrot.slane %v683, 1
    %v708 = vrot.slane %v684, 1
    %v709 = vrot.slane %v685, 1
    %v710 = vrot.slane %v686, 1
    %v711 = vrot.slane %v687, 1
    %v712 = vrot.slane %v688, 1
    %v713 = vrot.slane %v689, 1
    %v726 = vmul.f32 %v678, %v702
    %v727 = vmul.f32 %v679, %v703
    %v728 = vmul.f32 %v680, %v704
    %v729 = vmul.f32 %v681, %v705
    %v730 = vmul.f32 %v682, %v706
    %v731 = vmul.f32 %v683, %v707
    %v732 = vmul.f32 %v684, %v708
    %v733 = vmul.f32 %v685, %v709
    %v734 = vmul.f32 %v686, %v710
    %v735 = vmul.f32 %v687, %v711
    %v736 = vmul.f32 %v688, %v712
    %v737 = vmul.f32 %v689, %v713
    %v750 = vrot.slane %v486, 1
    %v751 = vrot.slane %v487, 1
    %v752 = vrot.slane %v488, 1
    %v753 = vrot.slane %v489, 1
    %v754 = vrot.slane %v490, 1
    %v755 = vrot.slane %v491, 1
    %v756 = vrot.slane %v492, 1
    %v757 = vrot.slane %v493, 1
    %v758 = vrot.slane %v494, 1
    %v759 = vrot.slane %v495, 1
    %v760 = vrot.slane %v496, 1
    %v761 = vrot.slane %v497, 1
    %v774 = vmul.f32 %v486, %v750
    %v775 = vmul.f32 %v487, %v751
    %v776 = vmul.f32 %v488, %v752
    %v777 = vmul.f32 %v489, %v753
    %v778 = vmul.f32 %v490, %v754
    %v779 = vmul.f32 %v491, %v755
    %v780 = vmul.f32 %v492, %v756
    %v781 = vmul.f32 %v493, %v757
    %v782 = vmul.f32 %v494, %v758
    %v783 = vmul.f32 %v495, %v759
    %v784 = vmul.f32 %v496, %v760
    %v785 = vmul.f32 %v497, %v761
    %v786 = vand.u32 2147483647, %v774
    %v787 = vand.u32 2147483647, %v775
    %v788 = vand.u32 2147483647, %v776
    %v789 = vand.u32 2147483647, %v777
    %v790 = vand.u32 2147483647, %v778
    %v791 = vand.u32 2147483647, %v779
    %v792 = vand.u32 2147483647, %v780
    %v793 = vand.u32 2147483647, %v781
    %v794 = vand.u32 2147483647, %v782
    %v795 = vand.u32 2147483647, %v783
    %v796 = vand.u32 2147483647, %v784
    %v797 = vand.u32 2147483647, %v785
    %v810 = vrot.slane %v144, 1
    %v811 = vrot.slane %v145, 1
    %v812 = vrot.slane %v146, 1
    %v813 = vrot.slane %v147, 1
    %v814 = vrot.slane %v148, 1
    %v815 = vrot.slane %v149, 1
    %v816 = vrot.slane %v150, 1
    %v817 = vrot.slane %v151, 1
    %v818 = vrot.slane %v152, 1
    %v819 = vrot.slane %v153, 1
    %v820 = vrot.slane %v154, 1
    %v821 = vrot.slane %v155, 1
    %v834 = vmul.f32 %v144, %v810
    %v835 = vmul.f32 %v145, %v811
    %v836 = vmul.f32 %v146, %v812
    %v837 = vmul.f32 %v147, %v813
    %v838 = vmul.f32 %v148, %v814
    %v839 = vmul.f32 %v149, %v815
    %v840 = vmul.f32 %v150, %v816
    %v841 = vmul.f32 %v151, %v817
    %v842 = vmul.f32 %v152, %v818
    %v843 = vmul.f32 %v153, %v819
    %v844 = vmul.f32 %v154, %v820
    %v845 = vmul.f32 %v155, %v821
    %v846 = vand.u32 2147483647, %v834
    %v847 = vand.u32 2147483647, %v835
    %v848 = vand.u32 2147483647, %v836
    %v849 = vand.u32 2147483647, %v837
    %v850 = vand.u32 2147483647, %v838
    %v851 = vand.u32 2147483647, %v839
    %v852 = vand.u32 2147483647, %v840
    %v853 = vand.u32 2147483647, %v841
    %v854 = vand.u32 2147483647, %v842
    %v855 = vand.u32 2147483647, %v843
    %v856 = vand.u32 2147483647, %v844
    %v857 = vand.u32 2147483647, %v845
    %v858 = vadd.f32 %v786, %v846
    %v859 = vadd.f32 %v787, %v847
    %v860 = vadd.f32 %v788, %v848
    %v861 = vadd.f32 %v789, %v849
    %v862 = vadd.f32 %v790, %v850
    %v863 = vadd.f32 %v791, %v851
    %v864 = vadd.f32 %v792, %v852
    %v865 = vadd.f32 %v793, %v853
    %v866 = vadd.f32 %v794, %v854
    %v867 = vadd.f32 %v795, %v855
    %v868 = vadd.f32 %v796, %v856
    %v869 = vadd.f32 %v797, %v857
    %v882 = vrot.slane %v726, 6
    %v883 = vrot.slane %v727, 6
    %v884 = vrot.slane %v728, 6
    %v885 = vrot.slane %v729, 6
    %v886 = vrot.slane %v730, 6
    %v887 = vrot.slane %v731, 6
    %v888 = vrot.slane %v732, 6
    %v889 = vrot.slane %v733, 6
    %v890 = vrot.slane %v734, 6
    %v891 = vrot.slane %v735, 6
    %v892 = vrot.slane %v736, 6
    %v893 = vrot.slane %v737, 6
    %v906 = vsub.f32 %v858, %v882
    %v907 = vsub.f32 %v859, %v883
    %v908 = vsub.f32 %v860, %v884
    %v909 = vsub.f32 %v861, %v885
    %v910 = vsub.f32 %v862, %v886
    %v911 = vsub.f32 %v863, %v887
    %v912 = vsub.f32 %v864, %v888
    %v913 = vsub.f32 %v865, %v889
    %v914 = vsub.f32 %v866, %v890
    %v915 = vsub.f32 %v867, %v891
    %v916 = vsub.f32 %v868, %v892
    %v917 = vsub.f32 %v869, %v893
    %v918 = vadd.f32 %v906, 1e-06
    %v919 = vadd.f32 %v907, 1e-06
    %v920 = vadd.f32 %v908, 1e-06
    %v921 = vadd.f32 %v909, 1e-06
    %v922 = vadd.f32 %v910, 1e-06
    %v923 = vadd.f32 %v911, 1e-06
    %v924 = vadd.f32 %v912, 1e-06
    %v925 = vadd.f32 %v913, 1e-06
    %v926 = vadd.f32 %v914, 1e-06
    %v927 = vadd.f32 %v915, 1e-06
    %v928 = vadd.f32 %v916, 1e-06
    %v929 = vadd.f32 %v917, 1e-06
    %v942 = vrot.slane %v918, 2
    %v943 = vrot.slane %v919, 2
    %v944 = vrot.slane %v920, 2
    %v945 = vrot.slane %v921, 2
    %v946 = vrot.slane %v922, 2
    %v947 = vrot.slane %v923, 2
    %v948 = vrot.slane %v924, 2
    %v949 = vrot.slane %v925, 2
    %v950 = vrot.slane %v926, 2
    %v951 = vrot.slane %v927, 2
    %v952 = vrot.slane %v928, 2
    %v953 = vrot.slane %v929, 2
    %v966 = vrcp.pop %v942
    %v967 = vmul.f32 %v942, %v966
    %v968 = vsub.f32 1.0, %v967
    %v969 = vmul.f32 %v966, %v968
    %v970 = vadd.f32 %v966, %v969
    %vm971 = vweird.f32 %v942
    %vm972 = vweird.f32 %v966
    %vm973 = vmor %vm971, %vm972
    %v974 = vsel %vm973, %v966, %v970
    %v975 = vand.u32 2147483647, %v942
    %vm976 = vcmp.eq.f32.partialorder %v975, 8.507059e+37
    %v977 = vand.u32 %v942, 2147483648
    %v978 = vor.u32 1.1754944e-38, %v977
    %v979 = vsel %vm976, %v978, %v974
    %v980 = vmul.f32 %v726, %v979
    %v981 = vrcp.pop %v943
    %v982 = vmul.f32 %v943, %v981
    %v983 = vsub.f32 1.0, %v982
    %v984 = vmul.f32 %v981, %v983
    %v985 = vadd.f32 %v981, %v984
    %vm986 = vweird.f32 %v943
    %vm987 = vweird.f32 %v981
    %vm988 = vmor %vm986, %vm987
    %v989 = vsel %vm988, %v981, %v985
    %v990 = vand.u32 2147483647, %v943
    %vm991 = vcmp.eq.f32.partialorder %v990, 8.507059e+37
    %v992 = vand.u32 %v943, 2147483648
    %v993 = vor.u32 1.1754944e-38, %v992
    %v994 = vsel %vm991, %v993, %v989
    %v995 = vmul.f32 %v727, %v994
    %v996 = vrcp.pop %v944
    %v997 = vmul.f32 %v944, %v996
    %v998 = vsub.f32 1.0, %v997
    %v999 = vmul.f32 %v996, %v998
    %v1000 = vadd.f32 %v996, %v999
    %vm1001 = vweird.f32 %v944
    %vm1002 = vweird.f32 %v996
    %vm1003 = vmor %vm1001, %vm1002
    %v1004 = vsel %vm1003, %v996, %v1000
    %v1005 = vand.u32 2147483647, %v944
    %vm1006 = vcmp.eq.f32.partialorder %v1005, 8.507059e+37
    %v1007 = vand.u32 %v944, 2147483648
    %v1008 = vor.u32 1.1754944e-38, %v1007
    %v1009 = vsel %vm1006, %v1008, %v1004
    %v1010 = vmul.f32 %v728, %v1009
    %v1011 = vrcp.pop %v945
    %v1012 = vmul.f32 %v945, %v1011
    %v1013 = vsub.f32 1.0, %v1012
    %v1014 = vmul.f32 %v1011, %v1013
    %v1015 = vadd.f32 %v1011, %v1014
    %vm1016 = vweird.f32 %v945
    %vm1017 = vweird.f32 %v1011
    %vm1018 = vmor %vm1016, %vm1017
    %v1019 = vsel %vm1018, %v1011, %v1015
    %v1020 = vand.u32 2147483647, %v945
    %vm1021 = vcmp.eq.f32.partialorder %v1020, 8.507059e+37
    %v1022 = vand.u32 %v945, 2147483648
    %v1023 = vor.u32 1.1754944e-38, %v1022
    %v1024 = vsel %vm1021, %v1023, %v1019
    %v1025 = vmul.f32 %v729, %v1024
    %v1026 = vrcp.pop %v946
    %v1027 = vmul.f32 %v946, %v1026
    %v1028 = vsub.f32 1.0, %v1027
    %v1029 = vmul.f32 %v1026, %v1028
    %v1030 = vadd.f32 %v1026, %v1029
    %vm1031 = vweird.f32 %v946
    %vm1032 = vweird.f32 %v1026
    %vm1033 = vmor %vm1031, %vm1032
    %v1034 = vsel %vm1033, %v1026, %v1030
    %v1035 = vand.u32 2147483647, %v946
    %vm1036 = vcmp.eq.f32.partialorder %v1035, 8.507059e+37
    %v1037 = vand.u32 %v946, 2147483648
    %v1038 = vor.u32 1.1754944e-38, %v1037
    %v1039 = vsel %vm1036, %v1038, %v1034
    %v1040 = vmul.f32 %v730, %v1039
    %v1041 = vrcp.pop %v947
    %v1042 = vmul.f32 %v947, %v1041
    %v1043 = vsub.f32 1.0, %v1042
    %v1044 = vmul.f32 %v1041, %v1043
    %v1045 = vadd.f32 %v1041, %v1044
    %vm1046 = vweird.f32 %v947
    %vm1047 = vweird.f32 %v1041
    %vm1048 = vmor %vm1046, %vm1047
    %v1049 = vsel %vm1048, %v1041, %v1045
    %v1050 = vand.u32 2147483647, %v947
    %vm1051 = vcmp.eq.f32.partialorder %v1050, 8.507059e+37
    %v1052 = vand.u32 %v947, 2147483648
    %v1053 = vor.u32 1.1754944e-38, %v1052
    %v1054 = vsel %vm1051, %v1053, %v1049
    %v1055 = vmul.f32 %v731, %v1054
    %v1056 = vrcp.pop %v948
    %v1057 = vmul.f32 %v948, %v1056
    %v1058 = vsub.f32 1.0, %v1057
    %v1059 = vmul.f32 %v1056, %v1058
    %v1060 = vadd.f32 %v1056, %v1059
    %vm1061 = vweird.f32 %v948
    %vm1062 = vweird.f32 %v1056
    %vm1063 = vmor %vm1061, %vm1062
    %v1064 = vsel %vm1063, %v1056, %v1060
    %v1065 = vand.u32 2147483647, %v948
    %vm1066 = vcmp.eq.f32.partialorder %v1065, 8.507059e+37
    %v1067 = vand.u32 %v948, 2147483648
    %v1068 = vor.u32 1.1754944e-38, %v1067
    %v1069 = vsel %vm1066, %v1068, %v1064
    %v1070 = vmul.f32 %v732, %v1069
    %v1071 = vrcp.pop %v949
    %v1072 = vmul.f32 %v949, %v1071
    %v1073 = vsub.f32 1.0, %v1072
    %v1074 = vmul.f32 %v1071, %v1073
    %v1075 = vadd.f32 %v1071, %v1074
    %vm1076 = vweird.f32 %v949
    %vm1077 = vweird.f32 %v1071
    %vm1078 = vmor %vm1076, %vm1077
    %v1079 = vsel %vm1078, %v1071, %v1075
    %v1080 = vand.u32 2147483647, %v949
    %vm1081 = vcmp.eq.f32.partialorder %v1080, 8.507059e+37
    %v1082 = vand.u32 %v949, 2147483648
    %v1083 = vor.u32 1.1754944e-38, %v1082
    %v1084 = vsel %vm1081, %v1083, %v1079
    %v1085 = vmul.f32 %v733, %v1084
    %v1086 = vrcp.pop %v950
    %v1087 = vmul.f32 %v950, %v1086
    %v1088 = vsub.f32 1.0, %v1087
    %v1089 = vmul.f32 %v1086, %v1088
    %v1090 = vadd.f32 %v1086, %v1089
    %vm1091 = vweird.f32 %v950
    %vm1092 = vweird.f32 %v1086
    %vm1093 = vmor %vm1091, %vm1092
    %v1094 = vsel %vm1093, %v1086, %v1090
    %v1095 = vand.u32 2147483647, %v950
    %vm1096 = vcmp.eq.f32.partialorder %v1095, 8.507059e+37
    %v1097 = vand.u32 %v950, 2147483648
    %v1098 = vor.u32 1.1754944e-38, %v1097
    %v1099 = vsel %vm1096, %v1098, %v1094
    %v1100 = vmul.f32 %v734, %v1099
    %v1101 = vrcp.pop %v951
    %v1102 = vmul.f32 %v951, %v1101
    %v1103 = vsub.f32 1.0, %v1102
    %v1104 = vmul.f32 %v1101, %v1103
    %v1105 = vadd.f32 %v1101, %v1104
    %vm1106 = vweird.f32 %v951
    %vm1107 = vweird.f32 %v1101
    %vm1108 = vmor %vm1106, %vm1107
    %v1109 = vsel %vm1108, %v1101, %v1105
    %v1110 = vand.u32 2147483647, %v951
    %vm1111 = vcmp.eq.f32.partialorder %v1110, 8.507059e+37
    %v1112 = vand.u32 %v951, 2147483648
    %v1113 = vor.u32 1.1754944e-38, %v1112
    %v1114 = vsel %vm1111, %v1113, %v1109
    %v1115 = vmul.f32 %v735, %v1114
    %v1116 = vrcp.pop %v952
    %v1117 = vmul.f32 %v952, %v1116
    %v1118 = vsub.f32 1.0, %v1117
    %v1119 = vmul.f32 %v1116, %v1118
    %v1120 = vadd.f32 %v1116, %v1119
    %vm1121 = vweird.f32 %v952
    %vm1122 = vweird.f32 %v1116
    %vm1123 = vmor %vm1121, %vm1122
    %v1124 = vsel %vm1123, %v1116, %v1120
    %v1125 = vand.u32 2147483647, %v952
    %vm1126 = vcmp.eq.f32.partialorder %v1125, 8.507059e+37
    %v1127 = vand.u32 %v952, 2147483648
    %v1128 = vor.u32 1.1754944e-38, %v1127
    %v1129 = vsel %vm1126, %v1128, %v1124
    %v1130 = vmul.f32 %v736, %v1129
    %v1131 = vrcp.pop %v953
    %v1132 = vmul.f32 %v953, %v1131
    %v1133 = vsub.f32 1.0, %v1132
    %v1134 = vmul.f32 %v1131, %v1133
    %v1135 = vadd.f32 %v1131, %v1134
    %vm1136 = vweird.f32 %v953
    %vm1137 = vweird.f32 %v1131
    %vm1138 = vmor %vm1136, %vm1137
    %v1139 = vsel %vm1138, %v1131, %v1135
    %v1140 = vand.u32 2147483647, %v953
    %vm1141 = vcmp.eq.f32.partialorder %v1140, 8.507059e+37
    %v1142 = vand.u32 %v953, 2147483648
    %v1143 = vor.u32 1.1754944e-38, %v1142
    %v1144 = vsel %vm1141, %v1143, %v1139
    %v1145 = vmul.f32 %v737, %v1144
    %v1148 = vperm.slane %v129, 0
    %v1149 = vperm.slane %v129, 1
    %v1150 = vperm.slane %v129, 2
    %v1151 = vperm.slane %v129, 3
    %v1152 = vperm.slane %v129, 4
    %v1153 = vperm.slane %v129, 5
    %v1154 = vperm.slane %v129, 6
    %v1155 = vperm.slane %v129, 7
    %v1156 = vperm.slane %v131, 0
    %v1157 = vperm.slane %v131, 1
    %v1158 = vperm.slane %v131, 2
    %v1159 = vperm.slane %v131, 3
    %v1172 = vmul.f32 %v980, %v1148
    %v1173 = vmul.f32 %v995, %v1149
    %v1174 = vmul.f32 %v1010, %v1150
    %v1175 = vmul.f32 %v1025, %v1151
    %v1176 = vmul.f32 %v1040, %v1152
    %v1177 = vmul.f32 %v1055, %v1153
    %v1178 = vmul.f32 %v1070, %v1154
    %v1179 = vmul.f32 %v1085, %v1155
    %v1180 = vmul.f32 %v1100, %v1156
    %v1181 = vmul.f32 %v1115, %v1157
    %v1182 = vmul.f32 %v1130, %v1158
    %v1183 = vmul.f32 %v1145, %v1159
    %1196 = vst [vmem:[#allocation1] sm:$0xff] %v1172
    %1197 = vst [vmem:[#allocation1 + $0x9] sm:$0xff] %v1173
    %1198 = vst [vmem:[#allocation1 + $0x12] sm:$0xff] %v1174
    %1199 = vst [vmem:[#allocation1 + $0x1b] sm:$0xff] %v1175
    %1200 = vst [vmem:[#allocation1 + $0x24] sm:$0xff] %v1176
    %1201 = vst [vmem:[#allocation1 + $0x2d] sm:$0xff] %v1177
    %1202 = vst [vmem:[#allocation1 + $0x36] sm:$0xff] %v1178
    %1203 = vst [vmem:[#allocation1 + $0x3f] sm:$0xff] %v1179
    %s1204 = scalar_lea.vmem [#allocation1], 1
    %v1205 = vld [vmem:[%s1204] ss:$9 sm:$0xff]
    %1206 = vst [vmem:[#allocation1] sm:$0xff] %v1180
    %1207 = vst [vmem:[#allocation1 + $0x9] sm:$0xff] %v1181
    %1208 = vst [vmem:[#allocation1 + $0x12] sm:$0xff] %v1182
    %1209 = vst [vmem:[#allocation1 + $0x1b] sm:$0xff] %v1183
    %v1210 = vld [vmem:[%s1204] ss:$9 sm:$0xff]
    %v1213 = vmul.f32 %v76, %v1205
    %v1214 = vmul.f32 %v78, %v1210
    %v1215 = vsub.f32 %v169, %v1213
    %v1216 = vsub.f32 %v170, %v1214
    %v1217 = vadd.f32 %v1215, %v186
    %v1218 = vadd.f32 %v1216, %v188
    %1219 = vst [vmem:[#allocation1] ss:$4 sm:$0xff] %v162
    %s1220 = scalar_lea.vmem [#allocation1], 32
    %1221 = vst [vmem:[%s1220] ss:$4 sm:$0xff] %v163
    %v1222 = vld.sshfl [vmem:[#allocation1] sm:$0xff pattern:$0x73625140]
    %v1223 = vld.sshfl [vmem:[#allocation1 + $0x8] sm:$0xff pattern:$0x73625140]
    %v1224 = vld.sshfl [vmem:[#allocation1 + $0x10] sm:$0xff pattern:$0x73625140]
    %v1225 = vld.sshfl [vmem:[#allocation1 + $0x18] sm:$0xff pattern:$0x73625140]
    %v1226 = vld.sshfl [vmem:[#allocation1 + $0x20] sm:$0xff pattern:$0x73625140]
    %v1227 = vld.sshfl [vmem:[#allocation1 + $0x28] sm:$0xff pattern:$0x73625140]
    %v1228 = vld.sshfl [vmem:[#allocation1 + $0x30] sm:$0xff pattern:$0x73625140]
    %v1229 = vld.sshfl [vmem:[#allocation1 + $0x38] sm:$0xff pattern:$0x73625140]
    %1230 = vst [vmem:[#allocation1] ss:$4 sm:$0xff] %v164
    %v1231 = vld.sshfl [vmem:[#allocation1] sm:$0xff pattern:$0x73625140]
    %v1232 = vld.sshfl [vmem:[#allocation1 + $0x8] sm:$0xff pattern:$0x73625140]
    %v1233 = vld.sshfl [vmem:[#allocation1 + $0x10] sm:$0xff pattern:$0x73625140]
    %v1234 = vld.sshfl [vmem:[#allocation1 + $0x18] sm:$0xff pattern:$0x73625140]
    %v1235 = vrot.slane %v1222, 5
    %v1236 = vrot.slane %v1223, 5
    %v1237 = vrot.slane %v1224, 5
    %v1238 = vrot.slane %v1225, 5
    %v1239 = vrot.slane %v1226, 5
    %v1240 = vrot.slane %v1227, 5
    %v1241 = vrot.slane %v1228, 5
    %v1242 = vrot.slane %v1229, 5
    %v1243 = vrot.slane %v1231, 5
    %v1244 = vrot.slane %v1232, 5
    %v1245 = vrot.slane %v1233, 5
    %v1246 = vrot.slane %v1234, 5
    %v1259 = vrcp.pop %v1235
    %v1260 = vmul.f32 %v1235, %v1259
    %v1261 = vsub.f32 1.0, %v1260
    %v1262 = vmul.f32 %v1259, %v1261
    %v1263 = vadd.f32 %v1259, %v1262
    %vm1264 = vweird.f32 %v1235
    %vm1265 = vweird.f32 %v1259
    %vm1266 = vmor %vm1264, %vm1265
    %v1267 = vsel %vm1266, %v1259, %v1263
    %v1268 = vand.u32 2147483647, %v1235
    %vm1269 = vcmp.eq.f32.partialorder %v1268, 8.507059e+37
    %v1270 = vand.u32 %v1235, 2147483648
    %v1271 = vor.u32 1.1754944e-38, %v1270
    %v1272 = vsel %vm1269, %v1271, %v1267
    %v1273 = vmul.f32 %v144, %v1272
    %v1274 = vrcp.pop %v1236
    %v1275 = vmul.f32 %v1236, %v1274
    %v1276 = vsub.f32 1.0, %v1275
    %v1277 = vmul.f32 %v1274, %v1276
    %v1278 = vadd.f32 %v1274, %v1277
    %vm1279 = vweird.f32 %v1236
    %vm1280 = vweird.f32 %v1274
    %vm1281 = vmor %vm1279, %vm1280
    %v1282 = vsel %vm1281, %v1274, %v1278
    %v1283 = vand.u32 2147483647, %v1236
    %vm1284 = vcmp.eq.f32.partialorder %v1283, 8.507059e+37
    %v1285 = vand.u32 %v1236, 2147483648
    %v1286 = vor.u32 1.1754944e-38, %v1285
    %v1287 = vsel %vm1284, %v1286, %v1282
    %v1288 = vmul.f32 %v145, %v1287
    %v1289 = vrcp.pop %v1237
    %v1290 = vmul.f32 %v1237, %v1289
    %v1291 = vsub.f32 1.0, %v1290
    %v1292 = vmul.f32 %v1289, %v1291
    %v1293 = vadd.f32 %v1289, %v1292
    %vm1294 = vweird.f32 %v1237
    %vm1295 = vweird.f32 %v1289
    %vm1296 = vmor %vm1294, %vm1295
    %v1297 = vsel %vm1296, %v1289, %v1293
    %v1298 = vand.u32 2147483647, %v1237
    %vm1299 = vcmp.eq.f32.partialorder %v1298, 8.507059e+37
    %v1300 = vand.u32 %v1237, 2147483648
    %v1301 = vor.u32 1.1754944e-38, %v1300
    %v1302 = vsel %vm1299, %v1301, %v1297
    %v1303 = vmul.f32 %v146, %v1302
    %v1304 = vrcp.pop %v1238
    %v1305 = vmul.f32 %v1238, %v1304
    %v1306 = vsub.f32 1.0, %v1305
    %v1307 = vmul.f32 %v1304, %v1306
    %v1308 = vadd.f32 %v1304, %v1307
    %vm1309 = vweird.f32 %v1238
    %vm1310 = vweird.f32 %v1304
    %vm1311 = vmor %vm1309, %vm1310
    %v1312 = vsel %vm1311, %v1304, %v1308
    %v1313 = vand.u32 2147483647, %v1238
    %vm1314 = vcmp.eq.f32.partialorder %v1313, 8.507059e+37
    %v1315 = vand.u32 %v1238, 2147483648
    %v1316 = vor.u32 1.1754944e-38, %v1315
    %v1317 = vsel %vm1314, %v1316, %v1312
    %v1318 = vmul.f32 %v147, %v1317
    %v1319 = vrcp.pop %v1239
    %v1320 = vmul.f32 %v1239, %v1319
    %v1321 = vsub.f32 1.0, %v1320
    %v1322 = vmul.f32 %v1319, %v1321
    %v1323 = vadd.f32 %v1319, %v1322
    %vm1324 = vweird.f32 %v1239
    %vm1325 = vweird.f32 %v1319
    %vm1326 = vmor %vm1324, %vm1325
    %v1327 = vsel %vm1326, %v1319, %v1323
    %v1328 = vand.u32 2147483647, %v1239
    %vm1329 = vcmp.eq.f32.partialorder %v1328, 8.507059e+37
    %v1330 = vand.u32 %v1239, 2147483648
    %v1331 = vor.u32 1.1754944e-38, %v1330
    %v1332 = vsel %vm1329, %v1331, %v1327
    %v1333 = vmul.f32 %v148, %v1332
    %v1334 = vrcp.pop %v1240
    %v1335 = vmul.f32 %v1240, %v1334
    %v1336 = vsub.f32 1.0, %v1335
    %v1337 = vmul.f32 %v1334, %v1336
    %v1338 = vadd.f32 %v1334, %v1337
    %vm1339 = vweird.f32 %v1240
    %vm1340 = vweird.f32 %v1334
    %vm1341 = vmor %vm1339, %vm1340
    %v1342 = vsel %vm1341, %v1334, %v1338
    %v1343 = vand.u32 2147483647, %v1240
    %vm1344 = vcmp.eq.f32.partialorder %v1343, 8.507059e+37
    %v1345 = vand.u32 %v1240, 2147483648
    %v1346 = vor.u32 1.1754944e-38, %v1345
    %v1347 = vsel %vm1344, %v1346, %v1342
    %v1348 = vmul.f32 %v149, %v1347
    %v1349 = vrcp.pop %v1241
    %v1350 = vmul.f32 %v1241, %v1349
    %v1351 = vsub.f32 1.0, %v1350
    %v1352 = vmul.f32 %v1349, %v1351
    %v1353 = vadd.f32 %v1349, %v1352
    %vm1354 = vweird.f32 %v1241
    %vm1355 = vweird.f32 %v1349
    %vm1356 = vmor %vm1354, %vm1355
    %v1357 = vsel %vm1356, %v1349, %v1353
    %v1358 = vand.u32 2147483647, %v1241
    %vm1359 = vcmp.eq.f32.partialorder %v1358, 8.507059e+37
    %v1360 = vand.u32 %v1241, 2147483648
    %v1361 = vor.u32 1.1754944e-38, %v1360
    %v1362 = vsel %vm1359, %v1361, %v1357
    %v1363 = vmul.f32 %v150, %v1362
    %v1364 = vrcp.pop %v1242
    %v1365 = vmul.f32 %v1242, %v1364
    %v1366 = vsub.f32 1.0, %v1365
    %v1367 = vmul.f32 %v1364, %v1366
    %v1368 = vadd.f32 %v1364, %v1367
    %vm1369 = vweird.f32 %v1242
    %vm1370 = vweird.f32 %v1364
    %vm1371 = vmor %vm1369, %vm1370
    %v1372 = vsel %vm1371, %v1364, %v1368
    %v1373 = vand.u32 2147483647, %v1242
    %vm1374 = vcmp.eq.f32.partialorder %v1373, 8.507059e+37
    %v1375 = vand.u32 %v1242, 2147483648
    %v1376 = vor.u32 1.1754944e-38, %v1375
    %v1377 = vsel %vm1374, %v1376, %v1372
    %v1378 = vmul.f32 %v151, %v1377
    %v1379 = vrcp.pop %v1243
    %v1380 = vmul.f32 %v1243, %v1379
    %v1381 = vsub.f32 1.0, %v1380
    %v1382 = vmul.f32 %v1379, %v1381
    %v1383 = vadd.f32 %v1379, %v1382
    %vm1384 = vweird.f32 %v1243
    %vm1385 = vweird.f32 %v1379
    %vm1386 = vmor %vm1384, %vm1385
    %v1387 = vsel %vm1386, %v1379, %v1383
    %v1388 = vand.u32 2147483647, %v1243
    %vm1389 = vcmp.eq.f32.partialorder %v1388, 8.507059e+37
    %v1390 = vand.u32 %v1243, 2147483648
    %v1391 = vor.u32 1.1754944e-38, %v1390
    %v1392 = vsel %vm1389, %v1391, %v1387
    %v1393 = vmul.f32 %v152, %v1392
    %v1394 = vrcp.pop %v1244
    %v1395 = vmul.f32 %v1244, %v1394
    %v1396 = vsub.f32 1.0, %v1395
    %v1397 = vmul.f32 %v1394, %v1396
    %v1398 = vadd.f32 %v1394, %v1397
    %vm1399 = vweird.f32 %v1244
    %vm1400 = vweird.f32 %v1394
    %vm1401 = vmor %vm1399, %vm1400
    %v1402 = vsel %vm1401, %v1394, %v1398
    %v1403 = vand.u32 2147483647, %v1244
    %vm1404 = vcmp.eq.f32.partialorder %v1403, 8.507059e+37
    %v1405 = vand.u32 %v1244, 2147483648
    %v1406 = vor.u32 1.1754944e-38, %v1405
    %v1407 = vsel %vm1404, %v1406, %v1402
    %v1408 = vmul.f32 %v153, %v1407
    %v1409 = vrcp.pop %v1245
    %v1410 = vmul.f32 %v1245, %v1409
    %v1411 = vsub.f32 1.0, %v1410
    %v1412 = vmul.f32 %v1409, %v1411
    %v1413 = vadd.f32 %v1409, %v1412
    %vm1414 = vweird.f32 %v1245
    %vm1415 = vweird.f32 %v1409
    %vm1416 = vmor %vm1414, %vm1415
    %v1417 = vsel %vm1416, %v1409, %v1413
    %v1418 = vand.u32 2147483647, %v1245
    %vm1419 = vcmp.eq.f32.partialorder %v1418, 8.507059e+37
    %v1420 = vand.u32 %v1245, 2147483648
    %v1421 = vor.u32 1.1754944e-38, %v1420
    %v1422 = vsel %vm1419, %v1421, %v1417
    %v1423 = vmul.f32 %v154, %v1422
    %v1424 = vrcp.pop %v1246
    %v1425 = vmul.f32 %v1246, %v1424
    %v1426 = vsub.f32 1.0, %v1425
    %v1427 = vmul.f32 %v1424, %v1426
    %v1428 = vadd.f32 %v1424, %v1427
    %vm1429 = vweird.f32 %v1246
    %vm1430 = vweird.f32 %v1424
    %vm1431 = vmor %vm1429, %vm1430
    %v1432 = vsel %vm1431, %v1424, %v1428
    %v1433 = vand.u32 2147483647, %v1246
    %vm1434 = vcmp.eq.f32.partialorder %v1433, 8.507059e+37
    %v1435 = vand.u32 %v1246, 2147483648
    %v1436 = vor.u32 1.1754944e-38, %v1435
    %v1437 = vsel %vm1434, %v1436, %v1432
    %v1438 = vmul.f32 %v155, %v1437
    %v1439 = vadd.f32 %v1273, 1e-16
    %v1440 = vadd.f32 %v1288, 1e-16
    %v1441 = vadd.f32 %v1303, 1e-16
    %v1442 = vadd.f32 %v1318, 1e-16
    %v1443 = vadd.f32 %v1333, 1e-16
    %v1444 = vadd.f32 %v1348, 1e-16
    %v1445 = vadd.f32 %v1363, 1e-16
    %v1446 = vadd.f32 %v1378, 1e-16
    %v1447 = vadd.f32 %v1393, 1e-16
    %v1448 = vadd.f32 %v1408, 1e-16
    %v1449 = vadd.f32 %v1423, 1e-16
    %v1450 = vadd.f32 %v1438, 1e-16
    %v1451 = vlog2.pop %v1439
    %v1452 = vmul.f32 %v1451, 0.6931472
    %v1453 = vlog2.pop %v1440
    %v1454 = vmul.f32 %v1453, 0.6931472
    %v1455 = vlog2.pop %v1441
    %v1456 = vmul.f32 %v1455, 0.6931472
    %v1457 = vlog2.pop %v1442
    %v1458 = vmul.f32 %v1457, 0.6931472
    %v1459 = vlog2.pop %v1443
    %v1460 = vmul.f32 %v1459, 0.6931472
    %v1461 = vlog2.pop %v1444
    %v1462 = vmul.f32 %v1461, 0.6931472
    %v1463 = vlog2.pop %v1445
    %v1464 = vmul.f32 %v1463, 0.6931472
    %v1465 = vlog2.pop %v1446
    %v1466 = vmul.f32 %v1465, 0.6931472
    %v1467 = vlog2.pop %v1447
    %v1468 = vmul.f32 %v1467, 0.6931472
    %v1469 = vlog2.pop %v1448
    %v1470 = vmul.f32 %v1469, 0.6931472
    %v1471 = vlog2.pop %v1449
    %v1472 = vmul.f32 %v1471, 0.6931472
    %v1473 = vlog2.pop %v1450
    %v1474 = vmul.f32 %v1473, 0.6931472
    %v1475 = vsub.f32 %v253, %v132
    %v1476 = vsub.f32 %v268, %v133
    %v1477 = vsub.f32 %v283, %v134
    %v1478 = vsub.f32 %v298, %v135
    %v1479 = vsub.f32 %v313, %v136
    %v1480 = vsub.f32 %v328, %v137
    %v1481 = vsub.f32 %v343, %v138
    %v1482 = vsub.f32 %v358, %v139
    %v1483 = vsub.f32 %v373, %v140
    %v1484 = vsub.f32 %v388, %v141
    %v1485 = vsub.f32 %v403, %v142
    %v1486 = vsub.f32 %v418, %v143
    %v1487 = vsub.f32 %v91, %v1452
    %v1488 = vsub.f32 %v92, %v1454
    %v1489 = vsub.f32 %v93, %v1456
    %v1490 = vsub.f32 %v94, %v1458
    %v1491 = vsub.f32 %v95, %v1460
    %v1492 = vsub.f32 %v96, %v1462
    %v1493 = vsub.f32 %v97, %v1464
    %v1494 = vsub.f32 %v98, %v1466
    %v1495 = vsub.f32 %v99, %v1468
    %v1496 = vsub.f32 %v100, %v1470
    %v1497 = vsub.f32 %v101, %v1472
    %v1498 = vsub.f32 %v102, %v1474
    %v1499 = vmul.f32 %v1475, %v1475
    %v1500 = vmul.f32 %v1476, %v1476
    %v1501 = vmul.f32 %v1477, %v1477
    %v1502 = vmul.f32 %v1478, %v1478
    %v1503 = vmul.f32 %v1479, %v1479
    %v1504 = vmul.f32 %v1480, %v1480
    %v1505 = vmul.f32 %v1481, %v1481
    %v1506 = vmul.f32 %v1482, %v1482
    %v1507 = vmul.f32 %v1483, %v1483
    %v1508 = vmul.f32 %v1484, %v1484
    %v1509 = vmul.f32 %v1485, %v1485
    %v1510 = vmul.f32 %v1486, %v1486
    %v1511 = vmul.f32 %v1487, %v1487
    %v1512 = vmul.f32 %v1488, %v1488
    %v1513 = vmul.f32 %v1489, %v1489
    %v1514 = vmul.f32 %v1490, %v1490
    %v1515 = vmul.f32 %v1491, %v1491
    %v1516 = vmul.f32 %v1492, %v1492
    %v1517 = vmul.f32 %v1493, %v1493
    %v1518 = vmul.f32 %v1494, %v1494
    %v1519 = vmul.f32 %v1495, %v1495
    %v1520 = vmul.f32 %v1496, %v1496
    %v1521 = vmul.f32 %v1497, %v1497
    %v1522 = vmul.f32 %v1498, %v1498
    %v1535 = vrot.slane %v1511, 2
    %v1536 = vrot.slane %v1512, 2
    %v1537 = vrot.slane %v1513, 2
    %v1538 = vrot.slane %v1514, 2
    %v1539 = vrot.slane %v1515, 2
    %v1540 = vrot.slane %v1516, 2
    %v1541 = vrot.slane %v1517, 2
    %v1542 = vrot.slane %v1518, 2
    %v1543 = vrot.slane %v1519, 2
    %v1544 = vrot.slane %v1520, 2
    %v1545 = vrot.slane %v1521, 2
    %v1546 = vrot.slane %v1522, 2
    %v1559 = vadd.f32 %v1499, %v1535
    %v1560 = vadd.f32 %v1500, %v1536
    %v1561 = vadd.f32 %v1501, %v1537
    %v1562 = vadd.f32 %v1502, %v1538
    %v1563 = vadd.f32 %v1503, %v1539
    %v1564 = vadd.f32 %v1504, %v1540
    %v1565 = vadd.f32 %v1505, %v1541
    %v1566 = vadd.f32 %v1506, %v1542
    %v1567 = vadd.f32 %v1507, %v1543
    %v1568 = vadd.f32 %v1508, %v1544
    %v1569 = vadd.f32 %v1509, %v1545
    %v1570 = vadd.f32 %v1510, %v1546
    %v1583 = vrot.slane %v1559, 1
    %v1584 = vrot.slane %v1560, 1
    %v1585 = vrot.slane %v1561, 1
    %v1586 = vrot.slane %v1562, 1
    %v1587 = vrot.slane %v1563, 1
    %v1588 = vrot.slane %v1564, 1
    %v1589 = vrot.slane %v1565, 1
    %v1590 = vrot.slane %v1566, 1
    %v1591 = vrot.slane %v1567, 1
    %v1592 = vrot.slane %v1568, 1
    %v1593 = vrot.slane %v1569, 1
    %v1594 = vrot.slane %v1570, 1
    %v1607 = vadd.f32 %v1559, %v1583
    %v1608 = vadd.f32 %v1560, %v1584
    %v1609 = vadd.f32 %v1561, %v1585
    %v1610 = vadd.f32 %v1562, %v1586
    %v1611 = vadd.f32 %v1563, %v1587
    %v1612 = vadd.f32 %v1564, %v1588
    %v1613 = vadd.f32 %v1565, %v1589
    %v1614 = vadd.f32 %v1566, %v1590
    %v1615 = vadd.f32 %v1567, %v1591
    %v1616 = vadd.f32 %v1568, %v1592
    %v1617 = vadd.f32 %v1569, %v1593
    %v1618 = vadd.f32 %v1570, %v1594
    %vm1619 = vcmask 1047557
    %v1620 = vsel %vm1619, %v103, -inf
    %vm1621 = vcmask 1044480
    %v1622 = vsel %vm1621, %v115, -inf
    %v1623 = vmax.f32 %v1620, %v1622
    %v1624 = vrot.slane %v1623, 4
    %v1625 = vmax.f32 %v1623, %v1624
    %v1626 = vrot.slane %v1625, 2
    %v1627 = vmax.f32 %v1625, %v1626
    %v1628 = vrot.slane %v1627, 1
    %v1629 = vmax.f32 %v1627, %v1628
    %v1630 = vsel %vm1619, %v104, -inf
    %v1631 = vsel %vm1621, %v116, -inf
    %v1632 = vmax.f32 %v1630, %v1631
    %v1633 = vrot.slane %v1632, 4
    %v1634 = vmax.f32 %v1632, %v1633
    %v1635 = vrot.slane %v1634, 2
    %v1636 = vmax.f32 %v1634, %v1635
    %v1637 = vrot.slane %v1636, 1
    %v1638 = vmax.f32 %v1636, %v1637
    %v1639 = vsel %vm1619, %v105, -inf
    %v1640 = vsel %vm1621, %v117, -inf
    %v1641 = vmax.f32 %v1639, %v1640
    %v1642 = vrot.slane %v1641, 4
    %v1643 = vmax.f32 %v1641, %v1642
    %v1644 = vrot.slane %v1643, 2
    %v1645 = vmax.f32 %v1643, %v1644
    %v1646 = vrot.slane %v1645, 1
    %v1647 = vmax.f32 %v1645, %v1646
    %v1648 = vsel %vm1619, %v106, -inf
    %v1649 = vsel %vm1621, %v118, -inf
    %v1650 = vmax.f32 %v1648, %v1649
    %v1651 = vrot.slane %v1650, 4
    %v1652 = vmax.f32 %v1650, %v1651
    %v1653 = vrot.slane %v1652, 2
    %v1654 = vmax.f32 %v1652, %v1653
    %v1655 = vrot.slane %v1654, 1
    %v1656 = vmax.f32 %v1654, %v1655
    %v1657 = vsel %vm1619, %v107, -inf
    %v1658 = vsel %vm1621, %v119, -inf
    %v1659 = vmax.f32 %v1657, %v1658
    %v1660 = vrot.slane %v1659, 4
    %v1661 = vmax.f32 %v1659, %v1660
    %v1662 = vrot.slane %v1661, 2
    %v1663 = vmax.f32 %v1661, %v1662
    %v1664 = vrot.slane %v1663, 1
    %v1665 = vmax.f32 %v1663, %v1664
    %v1666 = vsel %vm1619, %v108, -inf
    %v1667 = vsel %vm1621, %v120, -inf
    %v1668 = vmax.f32 %v1666, %v1667
    %v1669 = vrot.slane %v1668, 4
    %v1670 = vmax.f32 %v1668, %v1669
    %v1671 = vrot.slane %v1670, 2
    %v1672 = vmax.f32 %v1670, %v1671
    %v1673 = vrot.slane %v1672, 1
    %v1674 = vmax.f32 %v1672, %v1673
    %v1675 = vsel %vm1619, %v109, -inf
    %v1676 = vsel %vm1621, %v121, -inf
    %v1677 = vmax.f32 %v1675, %v1676
    %v1678 = vrot.slane %v1677, 4
    %v1679 = vmax.f32 %v1677, %v1678
    %v1680 = vrot.slane %v1679, 2
    %v1681 = vmax.f32 %v1679, %v1680
    %v1682 = vrot.slane %v1681, 1
    %v1683 = vmax.f32 %v1681, %v1682
    %v1684 = vsel %vm1619, %v110, -inf
    %v1685 = vsel %vm1621, %v122, -inf
    %v1686 = vmax.f32 %v1684, %v1685
    %v1687 = vrot.slane %v1686, 4
    %v1688 = vmax.f32 %v1686, %v1687
    %v1689 = vrot.slane %v1688, 2
    %v1690 = vmax.f32 %v1688, %v1689
    %v1691 = vrot.slane %v1690, 1
    %v1692 = vmax.f32 %v1690, %v1691
    %v1693 = vsel %vm1619, %v111, -inf
    %v1694 = vsel %vm1621, %v123, -inf
    %v1695 = vmax.f32 %v1693, %v1694
    %v1696 = vrot.slane %v1695, 4
    %v1697 = vmax.f32 %v1695, %v1696
    %v1698 = vrot.slane %v1697, 2
    %v1699 = vmax.f32 %v1697, %v1698
    %v1700 = vrot.slane %v1699, 1
    %v1701 = vmax.f32 %v1699, %v1700
    %v1702 = vsel %vm1619, %v112, -inf
    %v1703 = vsel %vm1621, %v124, -inf
    %v1704 = vmax.f32 %v1702, %v1703
    %v1705 = vrot.slane %v1704, 4
    %v1706 = vmax.f32 %v1704, %v1705
    %v1707 = vrot.slane %v1706, 2
    %v1708 = vmax.f32 %v1706, %v1707
    %v1709 = vrot.slane %v1708, 1
    %v1710 = vmax.f32 %v1708, %v1709
    %v1711 = vsel %vm1619, %v113, -inf
    %v1712 = vsel %vm1621, %v125, -inf
    %v1713 = vmax.f32 %v1711, %v1712
    %v1714 = vrot.slane %v1713, 4
    %v1715 = vmax.f32 %v1713, %v1714
    %v1716 = vrot.slane %v1715, 2
    %v1717 = vmax.f32 %v1715, %v1716
    %v1718 = vrot.slane %v1717, 1
    %v1719 = vmax.f32 %v1717, %v1718
    %v1720 = vsel %vm1619, %v114, -inf
    %v1721 = vsel %vm1621, %v126, -inf
    %v1722 = vmax.f32 %v1720, %v1721
    %v1723 = vrot.slane %v1722, 4
    %v1724 = vmax.f32 %v1722, %v1723
    %v1725 = vrot.slane %v1724, 2
    %v1726 = vmax.f32 %v1724, %v1725
    %v1727 = vrot.slane %v1726, 1
    %v1728 = vmax.f32 %v1726, %v1727
    %v1729 = vsub.f32 %v103, %v1629
    %v1730 = vsub.f32 %v104, %v1638
    %v1731 = vsub.f32 %v105, %v1647
    %v1732 = vsub.f32 %v106, %v1656
    %v1733 = vsub.f32 %v107, %v1665
    %v1734 = vsub.f32 %v108, %v1674
    %v1735 = vsub.f32 %v109, %v1683
    %v1736 = vsub.f32 %v110, %v1692
    %v1737 = vsub.f32 %v111, %v1701
    %v1738 = vsub.f32 %v112, %v1710
    %v1739 = vsub.f32 %v113, %v1719
    %v1740 = vsub.f32 %v114, %v1728
    %v1741 = vsub.f32 %v115, %v1629
    %v1742 = vsub.f32 %v116, %v1638
    %v1743 = vsub.f32 %v117, %v1647
    %v1744 = vsub.f32 %v118, %v1656
    %v1745 = vsub.f32 %v119, %v1665
    %v1746 = vsub.f32 %v120, %v1674
    %v1747 = vsub.f32 %v121, %v1683
    %v1748 = vsub.f32 %v122, %v1692
    %v1749 = vsub.f32 %v123, %v1701
    %v1750 = vsub.f32 %v124, %v1710
    %v1751 = vsub.f32 %v125, %v1719
    %v1752 = vsub.f32 %v126, %v1728
    %v1753 = vmul.f32 %v1729, 1.442695
    %v1754 = vpow.pop %v1753
    %v1755 = vmul.f32 %v1730, 1.442695
    %v1756 = vpow.pop %v1755
    %v1757 = vmul.f32 %v1731, 1.442695
    %v1758 = vpow.pop %v1757
    %v1759 = vmul.f32 %v1732, 1.442695
    %v1760 = vpow.pop %v1759
    %v1761 = vmul.f32 %v1733, 1.442695
    %v1762 = vpow.pop %v1761
    %v1763 = vmul.f32 %v1734, 1.442695
    %v1764 = vpow.pop %v1763
    %v1765 = vmul.f32 %v1735, 1.442695
    %v1766 = vpow.pop %v1765
    %v1767 = vmul.f32 %v1736, 1.442695
    %v1768 = vpow.pop %v1767
    %v1769 = vmul.f32 %v1737, 1.442695
    %v1770 = vpow.pop %v1769
    %v1771 = vmul.f32 %v1738, 1.442695
    %v1772 = vpow.pop %v1771
    %v1773 = vmul.f32 %v1739, 1.442695
    %v1774 = vpow.pop %v1773
    %v1775 = vmul.f32 %v1740, 1.442695
    %v1776 = vpow.pop %v1775
    %v1777 = vmul.f32 %v1741, 1.442695
    %v1778 = vpow.pop %v1777
    %v1779 = vmul.f32 %v1742, 1.442695
    %v1780 = vpow.pop %v1779
    %v1781 = vmul.f32 %v1743, 1.442695
    %v1782 = vpow.pop %v1781
    %v1783 = vmul.f32 %v1744, 1.442695
    %v1784 = vpow.pop %v1783
    %v1785 = vmul.f32 %v1745, 1.442695
    %v1786 = vpow.pop %v1785
    %v1787 = vmul.f32 %v1746, 1.442695
    %v1788 = vpow.pop %v1787
    %v1789 = vmul.f32 %v1747, 1.442695
    %v1790 = vpow.pop %v1789
    %v1791 = vmul.f32 %v1748, 1.442695
    %v1792 = vpow.pop %v1791
    %v1793 = vmul.f32 %v1749, 1.442695
    %v1794 = vpow.pop %v1793
    %v1795 = vmul.f32 %v1750, 1.442695
    %v1796 = vpow.pop %v1795
    %v1797 = vmul.f32 %v1751, 1.442695
    %v1798 = vpow.pop %v1797
    %v1799 = vmul.f32 %v1752, 1.442695
    %v1800 = vpow.pop %v1799
    %vm1825 = vcmask 1042432
    %v1826 = vrot.slane %v1754, 5
    %v1827 = vrot.slane %v1778, 5
    %v1828 = vsel %vm1825, %v1826, %v1827
    %v1829 = vrot.slane %v1756, 5
    %v1830 = vrot.slane %v1780, 5
    %v1831 = vsel %vm1825, %v1829, %v1830
    %v1832 = vrot.slane %v1758, 5
    %v1833 = vrot.slane %v1782, 5
    %v1834 = vsel %vm1825, %v1832, %v1833
    %v1835 = vrot.slane %v1760, 5
    %v1836 = vrot.slane %v1784, 5
    %v1837 = vsel %vm1825, %v1835, %v1836
    %v1838 = vrot.slane %v1762, 5
    %v1839 = vrot.slane %v1786, 5
    %v1840 = vsel %vm1825, %v1838, %v1839
    %v1841 = vrot.slane %v1764, 5
    %v1842 = vrot.slane %v1788, 5
    %v1843 = vsel %vm1825, %v1841, %v1842
    %v1844 = vrot.slane %v1766, 5
    %v1845 = vrot.slane %v1790, 5
    %v1846 = vsel %vm1825, %v1844, %v1845
    %v1847 = vrot.slane %v1768, 5
    %v1848 = vrot.slane %v1792, 5
    %v1849 = vsel %vm1825, %v1847, %v1848
    %v1850 = vrot.slane %v1770, 5
    %v1851 = vrot.slane %v1794, 5
    %v1852 = vsel %vm1825, %v1850, %v1851
    %v1853 = vrot.slane %v1772, 5
    %v1854 = vrot.slane %v1796, 5
    %v1855 = vsel %vm1825, %v1853, %v1854
    %v1856 = vrot.slane %v1774, 5
    %v1857 = vrot.slane %v1798, 5
    %v1858 = vsel %vm1825, %v1856, %v1857
    %v1859 = vrot.slane %v1776, 5
    %v1860 = vrot.slane %v1800, 5
    %v1861 = vsel %vm1825, %v1859, %v1860
    %v1874 = vrot.slane %v1828, 4
    %v1875 = vadd.f32 %v1828, %v1874
    %v1876 = vrot.slane %v1875, 2
    %v1877 = vadd.f32 %v1875, %v1876
    %v1878 = vrot.slane %v1877, 1
    %v1879 = vadd.f32 %v1877, %v1878
    %v1880 = vrot.slane %v1831, 4
    %v1881 = vadd.f32 %v1831, %v1880
    %v1882 = vrot.slane %v1881, 2
    %v1883 = vadd.f32 %v1881, %v1882
    %v1884 = vrot.slane %v1883, 1
    %v1885 = vadd.f32 %v1883, %v1884
    %v1886 = vrot.slane %v1834, 4
    %v1887 = vadd.f32 %v1834, %v1886
    %v1888 = vrot.slane %v1887, 2
    %v1889 = vadd.f32 %v1887, %v1888
    %v1890 = vrot.slane %v1889, 1
    %v1891 = vadd.f32 %v1889, %v1890
    %v1892 = vrot.slane %v1837, 4
    %v1893 = vadd.f32 %v1837, %v1892
    %v1894 = vrot.slane %v1893, 2
    %v1895 = vadd.f32 %v1893, %v1894
    %v1896 = vrot.slane %v1895, 1
    %v1897 = vadd.f32 %v1895, %v1896
    %v1898 = vrot.slane %v1840, 4
    %v1899 = vadd.f32 %v1840, %v1898
    %v1900 = vrot.slane %v1899, 2
    %v1901 = vadd.f32 %v1899, %v1900
    %v1902 = vrot.slane %v1901, 1
    %v1903 = vadd.f32 %v1901, %v1902
    %v1904 = vrot.slane %v1843, 4
    %v1905 = vadd.f32 %v1843, %v1904
    %v1906 = vrot.slane %v1905, 2
    %v1907 = vadd.f32 %v1905, %v1906
    %v1908 = vrot.slane %v1907, 1
    %v1909 = vadd.f32 %v1907, %v1908
    %v1910 = vrot.slane %v1846, 4
    %v1911 = vadd.f32 %v1846, %v1910
    %v1912 = vrot.slane %v1911, 2
    %v1913 = vadd.f32 %v1911, %v1912
    %v1914 = vrot.slane %v1913, 1
    %v1915 = vadd.f32 %v1913, %v1914
    %v1916 = vrot.slane %v1849, 4
    %v1917 = vadd.f32 %v1849, %v1916
    %v1918 = vrot.slane %v1917, 2
    %v1919 = vadd.f32 %v1917, %v1918
    %v1920 = vrot.slane %v1919, 1
    %v1921 = vadd.f32 %v1919, %v1920
    %v1922 = vrot.slane %v1852, 4
    %v1923 = vadd.f32 %v1852, %v1922
    %v1924 = vrot.slane %v1923, 2
    %v1925 = vadd.f32 %v1923, %v1924
    %v1926 = vrot.slane %v1925, 1
    %v1927 = vadd.f32 %v1925, %v1926
    %v1928 = vrot.slane %v1855, 4
    %v1929 = vadd.f32 %v1855, %v1928
    %v1930 = vrot.slane %v1929, 2
    %v1931 = vadd.f32 %v1929, %v1930
    %v1932 = vrot.slane %v1931, 1
    %v1933 = vadd.f32 %v1931, %v1932
    %v1934 = vrot.slane %v1858, 4
    %v1935 = vadd.f32 %v1858, %v1934
    %v1936 = vrot.slane %v1935, 2
    %v1937 = vadd.f32 %v1935, %v1936
    %v1938 = vrot.slane %v1937, 1
    %v1939 = vadd.f32 %v1937, %v1938
    %v1940 = vrot.slane %v1861, 4
    %v1941 = vadd.f32 %v1861, %v1940
    %v1942 = vrot.slane %v1941, 2
    %v1943 = vadd.f32 %v1941, %v1942
    %v1944 = vrot.slane %v1943, 1
    %v1945 = vadd.f32 %v1943, %v1944
    %v1946 = vlog2.pop %v1879
    %v1947 = vmul.f32 %v1946, 0.6931472
    %v1948 = vlog2.pop %v1885
    %v1949 = vmul.f32 %v1948, 0.6931472
    %v1950 = vlog2.pop %v1891
    %v1951 = vmul.f32 %v1950, 0.6931472
    %v1952 = vlog2.pop %v1897
    %v1953 = vmul.f32 %v1952, 0.6931472
    %v1954 = vlog2.pop %v1903
    %v1955 = vmul.f32 %v1954, 0.6931472
    %v1956 = vlog2.pop %v1909
    %v1957 = vmul.f32 %v1956, 0.6931472
    %v1958 = vlog2.pop %v1915
    %v1959 = vmul.f32 %v1958, 0.6931472
    %v1960 = vlog2.pop %v1921
    %v1961 = vmul.f32 %v1960, 0.6931472
    %v1962 = vlog2.pop %v1927
    %v1963 = vmul.f32 %v1962, 0.6931472
    %v1964 = vlog2.pop %v1933
    %v1965 = vmul.f32 %v1964, 0.6931472
    %v1966 = vlog2.pop %v1939
    %v1967 = vmul.f32 %v1966, 0.6931472
    %v1968 = vlog2.pop %v1945
    %v1969 = vmul.f32 %v1968, 0.6931472
    %v1970 = vadd.f32 %v1629, %v1947
    %v1971 = vadd.f32 %v1638, %v1949
    %v1972 = vadd.f32 %v1647, %v1951
    %v1973 = vadd.f32 %v1656, %v1953
    %v1974 = vadd.f32 %v1665, %v1955
    %v1975 = vadd.f32 %v1674, %v1957
    %v1976 = vadd.f32 %v1683, %v1959
    %v1977 = vadd.f32 %v1692, %v1961
    %v1978 = vadd.f32 %v1701, %v1963
    %v1979 = vadd.f32 %v1710, %v1965
    %v1980 = vadd.f32 %v1719, %v1967
    %v1981 = vadd.f32 %v1728, %v1969
    %v1982 = vlaneseq
    %v1983 = vshrl.u32 %v1982, 7
    %v1984 = vcvt.s32.f32 %v1983
    %v1987 = vperm.slane %v159, 0
    %v1988 = vperm.slane %v159, 1
    %v1989 = vperm.slane %v159, 2
    %v1990 = vperm.slane %v159, 3
    %v1991 = vperm.slane %v159, 4
    %v1992 = vperm.slane %v159, 5
    %v1993 = vperm.slane %v159, 6
    %v1994 = vperm.slane %v159, 7
    %v1995 = vperm.slane %v161, 0
    %v1996 = vperm.slane %v161, 1
    %v1997 = vperm.slane %v161, 2
    %v1998 = vperm.slane %v161, 3
    %vm2011 = vcmp.ge.f32.partialorder %v1987, %v1984
    %vm2012 = vcmp.ge.f32.partialorder %v1988, %v1984
    %vm2013 = vcmp.ge.f32.partialorder %v1989, %v1984
    %vm2014 = vcmp.ge.f32.partialorder %v1990, %v1984
    %vm2015 = vcmp.ge.f32.partialorder %v1991, %v1984
    %vm2016 = vcmp.ge.f32.partialorder %v1992, %v1984
    %vm2017 = vcmp.ge.f32.partialorder %v1993, %v1984
    %vm2018 = vcmp.ge.f32.partialorder %v1994, %v1984
    %vm2019 = vcmp.ge.f32.partialorder %v1995, %v1984
    %vm2020 = vcmp.ge.f32.partialorder %v1996, %v1984
    %vm2021 = vcmp.ge.f32.partialorder %v1997, %v1984
    %vm2022 = vcmp.ge.f32.partialorder %v1998, %v1984
    %v2023 = vadd.f32 %v1984, 1.0
    %vm2024 = vcmp.lt.f32.partialorder %v1987, %v2023
    %vm2025 = vcmp.lt.f32.partialorder %v1988, %v2023
    %vm2026 = vcmp.lt.f32.partialorder %v1989, %v2023
    %vm2027 = vcmp.lt.f32.partialorder %v1990, %v2023
    %vm2028 = vcmp.lt.f32.partialorder %v1991, %v2023
    %vm2029 = vcmp.lt.f32.partialorder %v1992, %v2023
    %vm2030 = vcmp.lt.f32.partialorder %v1993, %v2023
    %vm2031 = vcmp.lt.f32.partialorder %v1994, %v2023
    %vm2032 = vcmp.lt.f32.partialorder %v1995, %v2023
    %vm2033 = vcmp.lt.f32.partialorder %v1996, %v2023
    %vm2034 = vcmp.lt.f32.partialorder %v1997, %v2023
    %vm2035 = vcmp.lt.f32.partialorder %v1998, %v2023
    %vm2036 = vmand %vm2011, %vm2024
    %vm2037 = vmand %vm2012, %vm2025
    %vm2038 = vmand %vm2013, %vm2026
    %vm2039 = vmand %vm2014, %vm2027
    %vm2040 = vmand %vm2015, %vm2028
    %vm2041 = vmand %vm2016, %vm2029
    %vm2042 = vmand %vm2017, %vm2030
    %vm2043 = vmand %vm2018, %vm2031
    %vm2044 = vmand %vm2019, %vm2032
    %vm2045 = vmand %vm2020, %vm2033
    %vm2046 = vmand %vm2021, %vm2034
    %vm2047 = vmand %vm2022, %vm2035
    %v2072 = vrot.slane %v103, 5
    %v2073 = vrot.slane %v115, 5
    %v2074 = vsel %vm1825, %v2072, %v2073
    %v2075 = vrot.slane %v104, 5
    %v2076 = vrot.slane %v116, 5
    %v2077 = vsel %vm1825, %v2075, %v2076
    %v2078 = vrot.slane %v105, 5
    %v2079 = vrot.slane %v117, 5
    %v2080 = vsel %vm1825, %v2078, %v2079
    %v2081 = vrot.slane %v106, 5
    %v2082 = vrot.slane %v118, 5
    %v2083 = vsel %vm1825, %v2081, %v2082
    %v2084 = vrot.slane %v107, 5
    %v2085 = vrot.slane %v119, 5
    %v2086 = vsel %vm1825, %v2084, %v2085
    %v2087 = vrot.slane %v108, 5
    %v2088 = vrot.slane %v120, 5
    %v2089 = vsel %vm1825, %v2087, %v2088
    %v2090 = vrot.slane %v109, 5
    %v2091 = vrot.slane %v121, 5
    %v2092 = vsel %vm1825, %v2090, %v2091
    %v2093 = vrot.slane %v110, 5
    %v2094 = vrot.slane %v122, 5
    %v2095 = vsel %vm1825, %v2093, %v2094
    %v2096 = vrot.slane %v111, 5
    %v2097 = vrot.slane %v123, 5
    %v2098 = vsel %vm1825, %v2096, %v2097
    %v2099 = vrot.slane %v112, 5
    %v2100 = vrot.slane %v124, 5
    %v2101 = vsel %vm1825, %v2099, %v2100
    %v2102 = vrot.slane %v113, 5
    %v2103 = vrot.slane %v125, 5
    %v2104 = vsel %vm1825, %v2102, %v2103
    %v2105 = vrot.slane %v114, 5
    %v2106 = vrot.slane %v126, 5
    %v2107 = vsel %vm1825, %v2105, %v2106
    %v2120 = vsel %vm2036, %v2074, 0.0
    %v2121 = vsel %vm2037, %v2077, 0.0
    %v2122 = vsel %vm2038, %v2080, 0.0
    %v2123 = vsel %vm2039, %v2083, 0.0
    %v2124 = vsel %vm2040, %v2086, 0.0
    %v2125 = vsel %vm2041, %v2089, 0.0
    %v2126 = vsel %vm2042, %v2092, 0.0
    %v2127 = vsel %vm2043, %v2095, 0.0
    %v2128 = vsel %vm2044, %v2098, 0.0
    %v2129 = vsel %vm2045, %v2101, 0.0
    %v2130 = vsel %vm2046, %v2104, 0.0
    %v2131 = vsel %vm2047, %v2107, 0.0
    %v2132 = vrot.slane %v2120, 4
    %v2133 = vadd.f32 %v2120, %v2132
    %v2134 = vrot.slane %v2133, 2
    %v2135 = vadd.f32 %v2133, %v2134
    %v2136 = vrot.slane %v2135, 1
    %v2137 = vadd.f32 %v2135, %v2136
    %v2138 = vrot.slane %v2121, 4
    %v2139 = vadd.f32 %v2121, %v2138
    %v2140 = vrot.slane %v2139, 2
    %v2141 = vadd.f32 %v2139, %v2140
    %v2142 = vrot.slane %v2141, 1
    %v2143 = vadd.f32 %v2141, %v2142
    %v2144 = vrot.slane %v2122, 4
    %v2145 = vadd.f32 %v2122, %v2144
    %v2146 = vrot.slane %v2145, 2
    %v2147 = vadd.f32 %v2145, %v2146
    %v2148 = vrot.slane %v2147, 1
    %v2149 = vadd.f32 %v2147, %v2148
    %v2150 = vrot.slane %v2123, 4
    %v2151 = vadd.f32 %v2123, %v2150
    %v2152 = vrot.slane %v2151, 2
    %v2153 = vadd.f32 %v2151, %v2152
    %v2154 = vrot.slane %v2153, 1
    %v2155 = vadd.f32 %v2153, %v2154
    %v2156 = vrot.slane %v2124, 4
    %v2157 = vadd.f32 %v2124, %v2156
    %v2158 = vrot.slane %v2157, 2
    %v2159 = vadd.f32 %v2157, %v2158
    %v2160 = vrot.slane %v2159, 1
    %v2161 = vadd.f32 %v2159, %v2160
    %v2162 = vrot.slane %v2125, 4
    %v2163 = vadd.f32 %v2125, %v2162
    %v2164 = vrot.slane %v2163, 2
    %v2165 = vadd.f32 %v2163, %v2164
    %v2166 = vrot.slane %v2165, 1
    %v2167 = vadd.f32 %v2165, %v2166
    %v2168 = vrot.slane %v2126, 4
    %v2169 = vadd.f32 %v2126, %v2168
    %v2170 = vrot.slane %v2169, 2
    %v2171 = vadd.f32 %v2169, %v2170
    %v2172 = vrot.slane %v2171, 1
    %v2173 = vadd.f32 %v2171, %v2172
    %v2174 = vrot.slane %v2127, 4
    %v2175 = vadd.f32 %v2127, %v2174
    %v2176 = vrot.slane %v2175, 2
    %v2177 = vadd.f32 %v2175, %v2176
    %v2178 = vrot.slane %v2177, 1
    %v2179 = vadd.f32 %v2177, %v2178
    %v2180 = vrot.slane %v2128, 4
    %v2181 = vadd.f32 %v2128, %v2180
    %v2182 = vrot.slane %v2181, 2
    %v2183 = vadd.f32 %v2181, %v2182
    %v2184 = vrot.slane %v2183, 1
    %v2185 = vadd.f32 %v2183, %v2184
    %v2186 = vrot.slane %v2129, 4
    %v2187 = vadd.f32 %v2129, %v2186
    %v2188 = vrot.slane %v2187, 2
    %v2189 = vadd.f32 %v2187, %v2188
    %v2190 = vrot.slane %v2189, 1
    %v2191 = vadd.f32 %v2189, %v2190
    %v2192 = vrot.slane %v2130, 4
    %v2193 = vadd.f32 %v2130, %v2192
    %v2194 = vrot.slane %v2193, 2
    %v2195 = vadd.f32 %v2193, %v2194
    %v2196 = vrot.slane %v2195, 1
    %v2197 = vadd.f32 %v2195, %v2196
    %v2198 = vrot.slane %v2131, 4
    %v2199 = vadd.f32 %v2131, %v2198
    %v2200 = vrot.slane %v2199, 2
    %v2201 = vadd.f32 %v2199, %v2200
    %v2202 = vrot.slane %v2201, 1
    %v2203 = vadd.f32 %v2201, %v2202
    %v2204 = vsub.f32 %v1970, %v2137
    %v2205 = vsub.f32 %v1971, %v2143
    %v2206 = vsub.f32 %v1972, %v2149
    %v2207 = vsub.f32 %v1973, %v2155
    %v2208 = vsub.f32 %v1974, %v2161
    %v2209 = vsub.f32 %v1975, %v2167
    %v2210 = vsub.f32 %v1976, %v2173
    %v2211 = vsub.f32 %v1977, %v2179
    %v2212 = vsub.f32 %v1978, %v2185
    %v2213 = vsub.f32 %v1979, %v2191
    %v2214 = vsub.f32 %v1980, %v2197
    %v2215 = vsub.f32 %v1981, %v2203
    %v2216 = vld [vmem:[#allocation8] ss:$8 sm:$0xf]
    %v2217 = vld [vmem:[#allocation8] ss:$8 sm:$0xf0]
    %v2218 = vor.u32 %v2216, %v2217
    %s2219 = scalar_lea.vmem [#allocation8], 64
    %v2220 = vld [vmem:[%s2219] ss:$8 sm:$0xf]
    %v2221 = vsel %vm167, %v189, 0.0
    %v2222 = vsel %vm168, %v190, 0.0
    %v2223 = vadd.f32 %v2218, %v2221
    %v2224 = vadd.f32 %v2220, %v2222
    %2225 = vst [vmem:[#allocation8] ss:$8 sm:$0xf] %v2223
    %2226 = vst [vmem:[#allocation8] ss:$8 sm:$0xf0] %v2223
    %v2227 = vlaneseq
    %vm2228 = vcmp.ge.s32.totalorder %v2227, 0
    %vm2229 = vcmp.lt.s32.totalorder %v2227, 512
    %vm2230 = vmand %vm2228, %vm2229
    %2231 = vst.msk [vmem:[%s2219] ss:$8 sm:$0xf] %vm2230, %v2224
    %2232 = vst.msk [vmem:[%s2219] ss:$8 sm:$0x0] %vm2230, %v2224
    %s2233 = scalar_lea.vmem [#allocation8], 1
    %v2234 = vld [vmem:[%s2233] ss:$8 sm:$0xf]
    %v2235 = vld [vmem:[%s2233] ss:$8 sm:$0xf0]
    %v2236 = vor.u32 %v2234, %v2235
    %s2237 = scalar_lea.vmem [#allocation8], 65
    %v2238 = vld [vmem:[%s2237] ss:$8 sm:$0xf]
    %v2239 = vsel %vm167, 1.0, 0.0
    %v2240 = vsel %vm168, 1.0, 0.0
    %v2241 = vadd.f32 %v2236, %v2239
    %v2242 = vadd.f32 %v2238, %v2240
    %2243 = vst [vmem:[%s2233] ss:$8 sm:$0xf] %v2241
    %2244 = vst [vmem:[%s2233] ss:$8 sm:$0xf0] %v2241
    %2245 = vst.msk [vmem:[%s2237] ss:$8 sm:$0xf] %vm2230, %v2242
    %2246 = vst.msk [vmem:[%s2237] ss:$8 sm:$0x0] %vm2230, %v2242
    %s2247 = scalar_lea.vmem [#allocation8], 2
    %v2248 = vld [vmem:[%s2247] ss:$8 sm:$0xf]
    %v2249 = vld [vmem:[%s2247] ss:$8 sm:$0xf0]
    %v2250 = vor.u32 %v2248, %v2249
    %s2251 = scalar_lea.vmem [#allocation8], 66
    %v2252 = vld [vmem:[%s2251] ss:$8 sm:$0xf]
    %v2253 = vsel %vm165, %v1217, 0.0
    %v2254 = vsel %vm166, %v1218, 0.0
    %v2255 = vadd.f32 %v2250, %v2253
    %v2256 = vadd.f32 %v2252, %v2254
    %2257 = vst [vmem:[%s2247] ss:$8 sm:$0xf] %v2255
    %2258 = vst [vmem:[%s2247] ss:$8 sm:$0xf0] %v2255
    %2259 = vst.msk [vmem:[%s2251] ss:$8 sm:$0xf] %vm2230, %v2256
    %2260 = vst.msk [vmem:[%s2251] ss:$8 sm:$0x0] %vm2230, %v2256
    %s2261 = scalar_lea.vmem [#allocation8], 3
    %v2262 = vld [vmem:[%s2261] ss:$8 sm:$0xf]
    %v2263 = vld [vmem:[%s2261] ss:$8 sm:$0xf0]
    %v2264 = vor.u32 %v2262, %v2263
    %s2265 = scalar_lea.vmem [#allocation8], 67
    %v2266 = vld [vmem:[%s2265] ss:$8 sm:$0xf]
    %v2267 = vsel %vm165, 1.0, 0.0
    %v2268 = vsel %vm166, 1.0, 0.0
    %v2269 = vadd.f32 %v2264, %v2267
    %v2270 = vadd.f32 %v2266, %v2268
    %2271 = vst [vmem:[%s2261] ss:$8 sm:$0xf] %v2269
    %2272 = vst [vmem:[%s2261] ss:$8 sm:$0xf0] %v2269
    %2273 = vst.msk [vmem:[%s2265] ss:$8 sm:$0xf] %vm2230, %v2270
    %2274 = vst.msk [vmem:[%s2265] ss:$8 sm:$0x0] %vm2230, %v2270
    %s2275 = scalar_lea.vmem [#allocation8], 4
    %v2276 = vld [vmem:[%s2275] ss:$8 sm:$0xf]
    %v2277 = vld [vmem:[%s2275] ss:$8 sm:$0xf0]
    %v2278 = vor.u32 %v2276, %v2277
    %s2279 = scalar_lea.vmem [#allocation8], 68
    %v2280 = vld [vmem:[%s2279] ss:$8 sm:$0xf]
    %2293 = vst [vmem:[#allocation1] sm:$0xff] %v1607
    %2294 = vst [vmem:[#allocation1 + $0x9] sm:$0xff] %v1608
    %2295 = vst [vmem:[#allocation1 + $0x12] sm:$0xff] %v1609
    %2296 = vst [vmem:[#allocation1 + $0x1b] sm:$0xff] %v1610
    %2297 = vst [vmem:[#allocation1 + $0x24] sm:$0xff] %v1611
    %2298 = vst [vmem:[#allocation1 + $0x2d] sm:$0xff] %v1612
    %2299 = vst [vmem:[#allocation1 + $0x36] sm:$0xff] %v1613
    %2300 = vst [vmem:[#allocation1 + $0x3f] sm:$0xff] %v1614
    %s2301 = scalar_lea.vmem [#allocation1], 1
    %v2302 = vld [vmem:[%s2301] ss:$9 sm:$0xff]
    %2303 = vst [vmem:[#allocation1] sm:$0xff] %v1615
    %2304 = vst [vmem:[#allocation1 + $0x9] sm:$0xff] %v1616
    %2305 = vst [vmem:[#allocation1 + $0x12] sm:$0xff] %v1617
    %2306 = vst [vmem:[#allocation1 + $0x1b] sm:$0xff] %v1618
    %v2307 = vld [vmem:[%s2301] ss:$9 sm:$0xff]
    %v2310 = vsel %vm165, %v2302, 0.0
    %v2311 = vsel %vm166, %v2307, 0.0
    %v2312 = vadd.f32 %v2278, %v2310
    %v2313 = vadd.f32 %v2280, %v2311
    %2314 = vst [vmem:[%s2275] ss:$8 sm:$0xf] %v2312
    %2315 = vst [vmem:[%s2275] ss:$8 sm:$0xf0] %v2312
    %2316 = vst.msk [vmem:[%s2279] ss:$8 sm:$0xf] %vm2230, %v2313
    %2317 = vst.msk [vmem:[%s2279] ss:$8 sm:$0x0] %vm2230, %v2313
    %s2318 = scalar_lea.vmem [#allocation8], 5
    %v2319 = vld [vmem:[%s2318] ss:$8 sm:$0xf]
    %v2320 = vld [vmem:[%s2318] ss:$8 sm:$0xf0]
    %v2321 = vor.u32 %v2319, %v2320
    %s2322 = scalar_lea.vmem [#allocation8], 69
    %v2323 = vld [vmem:[%s2322] ss:$8 sm:$0xf]
    %v2336 = vrot.slane %v2205, 7
    %v2337 = vrot.slane %v2206, 6
    %v2338 = vrot.slane %v2207, 5
    %v2339 = vrot.slane %v2208, 4
    %v2340 = vrot.slane %v2209, 3
    %v2341 = vrot.slane %v2210, 2
    %v2342 = vrot.slane %v2211, 1
    %v2343 = vrot.slane %v2213, 7
    %v2344 = vrot.slane %v2214, 6
    %v2345 = vrot.slane %v2215, 5
    %vm2346 = vcmask 1040384
    %v2347 = vsel %vm2346, %v2204, %v2336
    %vm2348 = vcmask 1042434
    %v2349 = vsel %vm2348, %v2337, %v2338
    %vm2350 = vcmask 1041408
    %v2351 = vsel %vm2350, %v2347, %v2349
    %vm2352 = vcmask 1044484
    %v2353 = vsel %vm2352, %v2339, %v2340
    %vm2354 = vcmask 1046534
    %v2355 = vsel %vm2354, %v2341, %v2342
    %vm2356 = vcmask 1045508
    %v2357 = vsel %vm2356, %v2353, %v2355
    %vm2358 = vcmask 1043456
    %v2359 = vsel %vm2358, %v2351, %v2357
    %v2360 = vsel %vm2346, %v2212, %v2343
    %v2361 = vsel %vm2348, %v2344, %v2345
    %v2362 = vsel %vm2350, %v2360, %v2361
    %v2365 = vsel %vm165, %v2359, 0.0
    %v2366 = vsel %vm166, %v2362, 0.0
    %v2367 = vadd.f32 %v2321, %v2365
    %v2368 = vadd.f32 %v2323, %v2366
    %2369 = vst [vmem:[%s2318] ss:$8 sm:$0xf] %v2367
    %2370 = vst [vmem:[%s2318] ss:$8 sm:$0xf0] %v2367
    %2371 = vst.msk [vmem:[%s2322] ss:$8 sm:$0xf] %vm2230, %v2368
    %2372 = vst.msk [vmem:[%s2322] ss:$8 sm:$0x0] %vm2230, %v2368
    // Predicated region
    $region30: #{tpu_custom_call.1} parent=1 // pred_check
      _
    $region31: #{tpu_custom_call.1} parent=1 // pred_check_branch
      %2374 = sbr.rel (0) target = $region33
    $region32: #{tpu_custom_call.1} parent=1 // pred_region
      %2376 = vsyncadd [#allocation4], 0
      %s2378 = sshll.u32 [#allocation8], 4
      %s2379 = int_to_ptr.vmem [resolvable:$true] %s2378
      %s2380 = sshll.u32 %s3, 4
      %s2381 = int_to_ptr.hbm [resolvable:$true] %s2380
      %2383 = dma.vmem_to_hbm [thread:$0]  %s2379, 1536, %s2381, [#allocation4]
    $region33: #{tpu_custom_call.1} parent=1 // pred_fallthru
      _
    // Predicated region
    $region34: #{tpu_custom_call.1} parent=1 // pred_check
      _
    $region35: #{tpu_custom_call.1} parent=1 // pred_check_branch
      %2385 = sbr.rel (0) target = $region37
    $region36: #{tpu_custom_call.1} parent=1 // pred_region
      %2387 = dma.done [#allocation4], 1536
    $region37: #{tpu_custom_call.1} parent=1 // pred_fallthru
      _
    %2388 = vsyncpa [#allocation3], 1
    %2389 = vsyncpa [#allocation6], 1
    %2390 = vsyncpa [#allocation4], 1

</llo_original>
